<compile_context>
chip_gen: v7x
topology: tpu7x:2x2x1
jax: 0.10.0
libtpu: 0.0.40
codegen_flags: <defaults>
</compile_context>

<pallas_src>
import jax
import jax.numpy as jnp
import numpy as np
from jax import lax
from jax.experimental import pallas as pl
from jax.experimental.pallas import tpu as pltpu

_EPS = 1e-5  # torch.nn.InstanceNorm2d default


# ------------------------------ fused SPADE kernel ------------------------------
def _spade_fused_kernel(x_ref, rnd_ref, scale_ref, seg_ref, mask_ref,
                        wsh_ref, bsh_ref, wgb_ref, bgb_ref,
                        out_ref, acc_ref):
    # x_ref, out_ref : (1, C, HW) f32          rnd_ref : (1, 1, HW) f32
    # scale_ref      : (C, 1) f32              seg_ref : (1, Cin_pad, S_ext) bf16
    # mask_ref       : (1, S) f32 (interior mask on the padded grid)
    # wsh_ref : (nh, 9*Cin_pad) bf16           bsh_ref : (nh, 1) f32
    # wgb_ref : (9, 2C, nh) bf16 (gamma rows then beta rows)
    # bgb_ref : (2C, 1) f32
    # acc_ref : (2C, S_ext) f32 scratch (shift-the-output conv accumulator)
    _, C, HW = x_ref.shape
    S = mask_ref.shape[1]
    S_ext = seg_ref.shape[2]
    E = (S_ext - S) // 2          # = Wp + 1
    Wp = E - 1                    # padded row width (W + 2)
    W = Wp - 2
    H = HW // W
    # flat-spatial tap offsets for a 3x3 conv on the (Hp, Wp) padded grid
    offs = [(dy - 1) * Wp + (dx - 1) for dy in range(3) for dx in range(3)]

    # ---- conv_shared: ONE im2col matmul over the padded-flat spatial axis ----
    seg = seg_ref[0]                                                  # (Cin_pad, S_ext) bf16
    im2col = jnp.concatenate([seg[:, E + o: E + o + S] for o in offs],
                             axis=0)                                  # (9*Cin_pad, S) bf16
    actv = jnp.dot(wsh_ref[...], im2col,
                   preferred_element_type=jnp.float32)                # (nh, S) f32
    # bias + ReLU; the mask only zeroes the 1-pixel halo (interior passes through),
    # so the second conv sees exact zero padding -- no full-buffer re-zero needed.
    actv = (jnp.maximum(actv + bsh_ref[...], 0.0) * mask_ref[...]).astype(jnp.bfloat16)

    # ---- conv_gamma | conv_beta fused: 9 taps, shift-the-OUTPUT accumulation ----
    acc_ref[...] = jnp.zeros_like(acc_ref)            # per-step zero: megacore-safe
    for k, o in enumerate(offs):
        part = jnp.dot(wgb_ref[k], actv,
                       preferred_element_type=jnp.float32)            # (2C, S) f32
        acc_ref[:, E - o: E - o + S] += part

    # ---- InstanceNorm2d(x + noise) (affine=False, eps=1e-5), single-pass stats ----
    xn = x_ref[0] + scale_ref[...] * rnd_ref[0]                       # (C, HW) f32
    s1 = jnp.sum(xn, axis=1, keepdims=True)
    s2 = jnp.sum(xn * xn, axis=1, keepdims=True)
    mean = s1 * (1.0 / HW)
    var = jnp.maximum(s2 * (1.0 / HW) - mean * mean, 0.0)             # clamp >= 0
    normalized = (xn - mean) * lax.rsqrt(var + _EPS)

    # ---- extract interior gamma/beta in compact (2C, HW) layout and modulate ----
    # TODO(synk): for large H switch to a tiled / reshape-based extraction.
    rows = [acc_ref[:, E + (y + 1) * Wp + 1: E + (y + 1) * Wp + 1 + W]
            for y in range(H)]
    gb = jnp.concatenate(rows, axis=1) + bgb_ref[...]                 # (2C, HW) f32
    gamma = gb[:C, :]
    beta = gb[C:, :]

    out_ref[0] = normalized * (1.0 + gamma) + beta


# ------------------------------- wrapper (NCHW API) -------------------------------
def spade_norm_forward(params, x, seg, noise_key):
    # x: (B, norm_nc, H, W) NCHW;  seg: (B, label_nc, H, W) NCHW
    B, C, H, W = x.shape
    label_nc = seg.shape[1]
    nh = params["w_shared"].shape[0]   # nhidden = 128
    HW = H * W
    Hp, Wp = H + 2, W + 2
    S = Hp * Wp
    E = Wp + 1
    S_ext = S + 2 * E
    Cin = -(-label_nc // 8) * 8        # pad conv-in channels to a sublane multiple

    # x stays in NCHW order -> (B, C, HW): lane-dense, no transposes.
    x_flat = x.reshape(B, C, HW).astype(jnp.float32)

    # Module noise: (randn(b, w, h, 1) * noise_scale).transpose(1, 3)
    # -> one random scalar per (b, spatial) in h*W + w order; per-channel scale in-kernel.
    rnd_raw = jax.random.normal(noise_key, (B, W, H), jnp.float32)
    rnd = jnp.transpose(rnd_raw, (0, 2, 1)).reshape(B, 1, HW)
    scale = params["noise_scale"].reshape(C, 1).astype(jnp.float32)

    # seg: bf16 MXU operand, channels padded to 8, 1-px spatial halo, flattened,
    # plus a flat halo of E so every conv tap is an in-range slice.
    # TODO(synk): with spatial tiling express this halo via the BlockSpec instead of jnp.pad.
    seg_p = jnp.pad(seg.astype(jnp.bfloat16),
                    ((0, 0), (0, Cin - label_nc), (1, 1), (1, 1)))
    seg_ext = jnp.pad(seg_p.reshape(B, Cin, S), ((0, 0), (0, 0), (E, E)))

    # Static interior (non-halo) mask on the padded grid.
    m = np.zeros((Hp, Wp), np.float32)
    m[1:H + 1, 1:W + 1] = 1.0
    mask = jnp.asarray(m.reshape(1, S))

    # torch conv weights -> matmul layouts (bf16 operands, f32 accumulation).
    w_sh = jnp.pad(params["w_shared"].reshape(nh, label_nc, 9).transpose(0, 2, 1),
                   ((0, 0), (0, 0), (0, Cin - label_nc)))
    w_sh = w_sh.reshape(nh, 9 * Cin).astype(jnp.bfloat16)                 # (nh, 9*Cin)
    b_sh = params["b_shared"].reshape(nh, 1).astype(jnp.float32)
    wg = params["w_gamma"].reshape(C, nh, 9).transpose(2, 0, 1)           # (9, C, nh)
    wb = params["w_beta"].reshape(C, nh, 9).transpose(2, 0, 1)
    w_gb = jnp.concatenate([wg, wb], axis=1).astype(jnp.bfloat16)         # (9, 2C, nh)
    b_gb = jnp.concatenate([params["b_gamma"], params["b_beta"]]).reshape(2 * C, 1)
    b_gb = b_gb.astype(jnp.float32)

    # Explicit VMEM budget (generous upper bound on double-buffered blocks + scratch).
    est = 4 * 4 * (C * HW + HW + Cin * S_ext + C * HW + 2 * C * S_ext
                   + nh * 9 * Cin + nh + 9 * 2 * C * nh + 2 * C + S)
    vmem_bytes = int(min(100 * 2 ** 20, max(32 * 2 ** 20, est)))

    out_flat = pl.pallas_call(
        _spade_fused_kernel,
        out_shape=jax.ShapeDtypeStruct((B, C, HW), jnp.float32),
        grid_spec=pltpu.PrefetchScalarGridSpec(
            num_scalar_prefetch=0,
            grid=(B,),
            in_specs=[
                pl.BlockSpec((1, C, HW), lambda b: (b, 0, 0)),            # x
                pl.BlockSpec((1, 1, HW), lambda b: (b, 0, 0)),            # noise draw
                pl.BlockSpec((C, 1), lambda b: (0, 0)),                   # noise_scale
                pl.BlockSpec((1, Cin, S_ext), lambda b: (b, 0, 0)),       # seg (flat, padded)
                pl.BlockSpec((1, S), lambda b: (0, 0)),                   # interior mask
                pl.BlockSpec((nh, 9 * Cin), lambda b: (0, 0)),            # w_shared
                pl.BlockSpec((nh, 1), lambda b: (0, 0)),                  # b_shared
                pl.BlockSpec((9, 2 * C, nh), lambda b: (0, 0, 0)),        # w_gamma|w_beta
                pl.BlockSpec((2 * C, 1), lambda b: (0, 0)),               # b_gamma|b_beta
            ],
            out_specs=pl.BlockSpec((1, C, HW), lambda b: (b, 0, 0)),
            scratch_shapes=[pltpu.VMEM((2 * C, S_ext), jnp.float32)],
        ),
        compiler_params=pltpu.CompilerParams(
            dimension_semantics=("parallel",),
            vmem_limit_bytes=vmem_bytes,
        ),
    )(x_flat, rnd, scale, seg_ext, mask, w_sh, b_sh, w_gb, b_gb)

    return out_flat.reshape(B, C, H, W)   # still NCHW, no transpose


# ------------------------------- reference (pure JAX) -------------------------------
def _conv3x3_nchw(inp, w, b, use_bf16):
    if use_bf16:
        inp = inp.astype(jnp.bfloat16)
        w = w.astype(jnp.bfloat16)
    out = lax.conv_general_dilated(
        inp, w, (1, 1), ((1, 1), (1, 1)),
        dimension_numbers=("NCHW", "OIHW", "NCHW"),
        preferred_element_type=jnp.float32)
    return out + b[None, :, None, None]


def _reference(params, x, seg, noise_nchw, use_bf16):
    xn = x + noise_nchw
    mu = xn.mean(axis=(2, 3), keepdims=True)
    var = ((xn - mu) ** 2).mean(axis=(2, 3), keepdims=True)
    normalized = (xn - mu) * lax.rsqrt(var + _EPS)
    actv = jax.nn.relu(_conv3x3_nchw(seg, params["w_shared"], params["b_shared"], use_bf16))
    gamma = _conv3x3_nchw(actv, params["w_gamma"], params["b_gamma"], use_bf16)
    beta = _conv3x3_nchw(actv, params["w_beta"], params["b_beta"], use_bf16)
    return normalized * (1 + gamma) + beta


def init_params(key, norm_nc, label_nc, nhidden=128):
    ks = jax.random.split(key, 7)
    return {
        # nn.Parameter(torch.zeros(norm_nc)) in the module; nonzero here so the
        # noise path is actually exercised by the check.
        "noise_scale": 0.50 * jax.random.normal(ks[6], (norm_nc,), jnp.float32),
        "w_shared": 0.10 * jax.random.normal(ks[0], (nhidden, label_nc, 3, 3), jnp.float32),
        "b_shared": 0.10 * jax.random.normal(ks[1], (nhidden,), jnp.float32),
        "w_gamma": 0.05 * jax.random.normal(ks[2], (norm_nc, nhidden, 3, 3), jnp.float32),
        "b_gamma": 0.05 * jax.random.normal(ks[3], (norm_nc,), jnp.float32),
        "w_beta": 0.05 * jax.random.normal(ks[4], (norm_nc, nhidden, 3, 3), jnp.float32),
        "b_beta": 0.05 * jax.random.normal(ks[5], (norm_nc,), jnp.float32),
    }


if __name__ == "__main__":
    B, norm_nc, label_nc, H, W = 2, 4, 4, 16, 16
    key = jax.random.PRNGKey(0)
    kx, kseg, knoise, kp = jax.random.split(key, 4)

    x = jax.random.normal(kx, (B, norm_nc, H, W), jnp.float32)
    seg = jax.random.normal(kseg, (B, label_nc, H, W), jnp.float32)
    params = init_params(kp, norm_nc, label_nc)

    out = spade_norm_forward(params, x, seg, knoise)
    out = jax.block_until_ready(out)

    # Same noise construction as the module / wrapper.
    rnd_raw = jax.random.normal(knoise, (B, W, H), jnp.float32)
    noise_nchw = jnp.transpose(rnd_raw[..., None] * params["noise_scale"], (0, 3, 2, 1))

    # Precision-matched reference (bf16 conv operands, f32 accumulation).
    ref_bf16 = _reference(params, x, seg, noise_nchw, use_bf16=True)
    np.testing.assert_allclose(np.asarray(out), np.asarray(ref_bf16), atol=2e-2, rtol=2e-2)

    # Full-f32 reference -- loose sanity check on the bf16-MXU path.
    ref_f32 = _reference(params, x, seg, noise_nchw, use_bf16=False)
    np.testing.assert_allclose(np.asarray(out), np.asarray(ref_f32), atol=1e-1, rtol=1e-1)

    print("KERNEL_OK")
</pallas_src>

<mosaic_0001>
module attributes {stable_mosaic.version = 11 : i64} {
  func.func @_spade_fused_kernel(%arg0: i32, %arg1: memref<1x4x256xf32, #tpu.memory_space<vmem>>, %arg2: memref<1x1x256xf32, #tpu.memory_space<vmem>>, %arg3: memref<4x1xf32, #tpu.memory_space<vmem>>, %arg4: memref<1x8x362xbf16, #tpu.memory_space<vmem>>, %arg5: memref<1x324xf32, #tpu.memory_space<vmem>>, %arg6: memref<128x72xbf16, #tpu.memory_space<vmem>>, %arg7: memref<128x1xf32, #tpu.memory_space<vmem>>, %arg8: memref<9x8x128xbf16, #tpu.memory_space<vmem>>, %arg9: memref<8x1xf32, #tpu.memory_space<vmem>>, %arg10: memref<1x4x256xf32, #tpu.memory_space<vmem>>, %arg11: memref<8x362xf32, #tpu.memory_space<vmem>>) attributes {dimension_semantics = [#tpu.dimension_semantics<parallel>], iteration_bounds = array<i64: 2>, scalar_prefetch = 0 : i64, scratch_operands = 1 : i64, tpu.core_type = #tpu.core_type<tc>, window_params = [{transform_indices = @transform_0, window_bounds = array<i64: 1, 4, 256>}, {transform_indices = @transform_1, window_bounds = array<i64: 1, 1, 256>}, {pipeline_mode = #tpu.pipeline_mode<synchronous>, transform_indices = @transform_2, window_bounds = array<i64: 4, 1>}, {transform_indices = @transform_3, window_bounds = array<i64: 1, 8, 362>}, {pipeline_mode = #tpu.pipeline_mode<synchronous>, transform_indices = @transform_4, window_bounds = array<i64: 1, 324>}, {pipeline_mode = #tpu.pipeline_mode<synchronous>, transform_indices = @transform_5, window_bounds = array<i64: 128, 72>}, {pipeline_mode = #tpu.pipeline_mode<synchronous>, transform_indices = @transform_6, window_bounds = array<i64: 128, 1>}, {pipeline_mode = #tpu.pipeline_mode<synchronous>, transform_indices = @transform_7, window_bounds = array<i64: 9, 8, 128>}, {pipeline_mode = #tpu.pipeline_mode<synchronous>, transform_indices = @transform_8, window_bounds = array<i64: 8, 1>}, {transform_indices = @transform_9, window_bounds = array<i64: 1, 4, 256>}]} {
    %c0 = arith.constant 0 : index
    %c0_0 = arith.constant 0 : index
    %c0_1 = arith.constant 0 : index
    %0 = vector.load %arg4[%c0, %c0_0, %c0_1] : memref<1x8x362xbf16, #tpu.memory_space<vmem>>, vector<1x8x362xbf16>
    %1 = vector.shape_cast %0 : vector<1x8x362xbf16> to vector<8x362xbf16>
    %2 = vector.extract_strided_slice %1 {offsets = [0, 0], sizes = [8, 324], strides = [1, 1]} : vector<8x362xbf16> to vector<8x324xbf16>
    %3 = vector.extract_strided_slice %1 {offsets = [0, 1], sizes = [8, 324], strides = [1, 1]} : vector<8x362xbf16> to vector<8x324xbf16>
    %4 = vector.extract_strided_slice %1 {offsets = [0, 2], sizes = [8, 324], strides = [1, 1]} : vector<8x362xbf16> to vector<8x324xbf16>
    %5 = vector.extract_strided_slice %1 {offsets = [0, 18], sizes = [8, 324], strides = [1, 1]} : vector<8x362xbf16> to vector<8x324xbf16>
    %6 = vector.extract_strided_slice %1 {offsets = [0, 19], sizes = [8, 324], strides = [1, 1]} : vector<8x362xbf16> to vector<8x324xbf16>
    %7 = vector.extract_strided_slice %1 {offsets = [0, 20], sizes = [8, 324], strides = [1, 1]} : vector<8x362xbf16> to vector<8x324xbf16>
    %8 = vector.extract_strided_slice %1 {offsets = [0, 36], sizes = [8, 324], strides = [1, 1]} : vector<8x362xbf16> to vector<8x324xbf16>
    %9 = vector.extract_strided_slice %1 {offsets = [0, 37], sizes = [8, 324], strides = [1, 1]} : vector<8x362xbf16> to vector<8x324xbf16>
    %10 = vector.extract_strided_slice %1 {offsets = [0, 38], sizes = [8, 324], strides = [1, 1]} : vector<8x362xbf16> to vector<8x324xbf16>
    %11 = tpu.concatenate %2, %3, %4, %5, %6, %7, %8, %9, %10 in 0 : vector<8x324xbf16>, vector<8x324xbf16>, vector<8x324xbf16>, vector<8x324xbf16>, vector<8x324xbf16>, vector<8x324xbf16>, vector<8x324xbf16>, vector<8x324xbf16>, vector<8x324xbf16> -> vector<72x324xbf16>
    %c0_2 = arith.constant 0 : index
    %c0_3 = arith.constant 0 : index
    %12 = vector.load %arg6[%c0_2, %c0_3] : memref<128x72xbf16, #tpu.memory_space<vmem>>, vector<128x72xbf16>
    %cst = arith.constant dense<0.000000e+00> : vector<128x324xf32>
    %13 = tpu.matmul %12, %11, %cst {dimension_numbers = #tpu.dot_dimension_numbers<[1], [0], [0], [1], [0, 0, 1, 1], [], []>} : vector<128x72xbf16>, vector<72x324xbf16>, vector<128x324xf32> -> vector<128x324xf32>
    %c0_4 = arith.constant 0 : index
    %c0_5 = arith.constant 0 : index
    %14 = vector.load %arg7[%c0_4, %c0_5] : memref<128x1xf32, #tpu.memory_space<vmem>>, vector<128x1xf32>
    %15 = vector.broadcast %14 : vector<128x1xf32> to vector<128x324xf32>
    %16 = arith.addf %13, %15 : vector<128x324xf32>
    %cst_6 = arith.constant 0.000000e+00 : f32
    %17 = vector.broadcast %cst_6 : f32 to vector<128x324xf32>
    %18 = arith.maximumf %16, %17 : vector<128x324xf32>
    %c0_7 = arith.constant 0 : index
    %c0_8 = arith.constant 0 : index
    %19 = vector.load %arg5[%c0_7, %c0_8] : memref<1x324xf32, #tpu.memory_space<vmem>>, vector<1x324xf32>
    %20 = vector.broadcast %19 : vector<1x324xf32> to vector<128x324xf32>
    %21 = arith.mulf %18, %20 : vector<128x324xf32>
    %22 = arith.truncf %21 : vector<128x324xf32> to vector<128x324xbf16>
    %cst_9 = arith.constant 0.000000e+00 : f32
    %23 = vector.broadcast %cst_9 : f32 to vector<8x362xf32>
    %c0_10 = arith.constant 0 : index
    %c0_11 = arith.constant 0 : index
    %24 = vector.load %arg11[%c0_10, %c0_11] : memref<8x362xf32, #tpu.memory_space<vmem>>, vector<8x362xf32>
    tpu.vector_store %arg11[%c0_10, %c0_11], %23 {strides = array<i32>} : memref<8x362xf32, #tpu.memory_space<vmem>>, vector<8x362xf32>,
    %c0_12 = arith.constant 0 : index
    %c0_13 = arith.constant 0 : index
    %c0_14 = arith.constant 0 : index
    %25 = vector.load %arg8[%c0_12, %c0_13, %c0_14] : memref<9x8x128xbf16, #tpu.memory_space<vmem>>, vector<1x8x128xbf16>
    %26 = vector.shape_cast %25 : vector<1x8x128xbf16> to vector<8x128xbf16>
    %cst_15 = arith.constant dense<0.000000e+00> : vector<8x324xf32>
    %27 = tpu.matmul %26, %22, %cst_15 {dimension_numbers = #tpu.dot_dimension_numbers<[1], [0], [0], [1], [0, 0, 1, 1], [], []>} : vector<8x128xbf16>, vector<128x324xbf16>, vector<8x324xf32> -> vector<8x324xf32>
    %c0_16 = arith.constant 0 : index
    %c38 = arith.constant 38 : index
    %28 = vector.load %arg11[%c0_16, %c38] : memref<8x362xf32, #tpu.memory_space<vmem>>, vector<8x324xf32>
    %29 = arith.addf %28, %27 : vector<8x324xf32>
    %c0_17 = arith.constant 0 : index
    %c38_18 = arith.constant 38 : index
    %30 = vector.load %arg11[%c0_17, %c38_18] : memref<8x362xf32, #tpu.memory_space<vmem>>, vector<8x324xf32>
    tpu.vector_store %arg11[%c0_17, %c38_18], %29 {strides = array<i32>} : memref<8x362xf32, #tpu.memory_space<vmem>>, vector<8x324xf32>,
    %c1 = arith.constant 1 : index
    %c0_19 = arith.constant 0 : index
    %c0_20 = arith.constant 0 : index
    %31 = vector.load %arg8[%c1, %c0_19, %c0_20] : memref<9x8x128xbf16, #tpu.memory_space<vmem>>, vector<1x8x128xbf16>
    %32 = vector.shape_cast %31 : vector<1x8x128xbf16> to vector<8x128xbf16>
    %cst_21 = arith.constant dense<0.000000e+00> : vector<8x324xf32>
    %33 = tpu.matmul %32, %22, %cst_21 {dimension_numbers = #tpu.dot_dimension_numbers<[1], [0], [0], [1], [0, 0, 1, 1], [], []>} : vector<8x128xbf16>, vector<128x324xbf16>, vector<8x324xf32> -> vector<8x324xf32>
    %c0_22 = arith.constant 0 : index
    %c37 = arith.constant 37 : index
    %34 = vector.load %arg11[%c0_22, %c37] : memref<8x362xf32, #tpu.memory_space<vmem>>, vector<8x324xf32>
    %35 = arith.addf %34, %33 : vector<8x324xf32>
    %c0_23 = arith.constant 0 : index
    %c37_24 = arith.constant 37 : index
    %36 = vector.load %arg11[%c0_23, %c37_24] : memref<8x362xf32, #tpu.memory_space<vmem>>, vector<8x324xf32>
    tpu.vector_store %arg11[%c0_23, %c37_24], %35 {strides = array<i32>} : memref<8x362xf32, #tpu.memory_space<vmem>>, vector<8x324xf32>,
    %c2 = arith.constant 2 : index
    %c0_25 = arith.constant 0 : index
    %c0_26 = arith.constant 0 : index
    %37 = vector.load %arg8[%c2, %c0_25, %c0_26] : memref<9x8x128xbf16, #tpu.memory_space<vmem>>, vector<1x8x128xbf16>
    %38 = vector.shape_cast %37 : vector<1x8x128xbf16> to vector<8x128xbf16>
    %cst_27 = arith.constant dense<0.000000e+00> : vector<8x324xf32>
    %39 = tpu.matmul %38, %22, %cst_27 {dimension_numbers = #tpu.dot_dimension_numbers<[1], [0], [0], [1], [0, 0, 1, 1], [], []>} : vector<8x128xbf16>, vector<128x324xbf16>, vector<8x324xf32> -> vector<8x324xf32>
    %c0_28 = arith.constant 0 : index
    %c36 = arith.constant 36 : index
    %40 = vector.load %arg11[%c0_28, %c36] : memref<8x362xf32, #tpu.memory_space<vmem>>, vector<8x324xf32>
    %41 = arith.addf %40, %39 : vector<8x324xf32>
    %c0_29 = arith.constant 0 : index
    %c36_30 = arith.constant 36 : index
    %42 = vector.load %arg11[%c0_29, %c36_30] : memref<8x362xf32, #tpu.memory_space<vmem>>, vector<8x324xf32>
    tpu.vector_store %arg11[%c0_29, %c36_30], %41 {strides = array<i32>} : memref<8x362xf32, #tpu.memory_space<vmem>>, vector<8x324xf32>,
    %c3 = arith.constant 3 : index
    %c0_31 = arith.constant 0 : index
    %c0_32 = arith.constant 0 : index
    %43 = vector.load %arg8[%c3, %c0_31, %c0_32] : memref<9x8x128xbf16, #tpu.memory_space<vmem>>, vector<1x8x128xbf16>
    %44 = vector.shape_cast %43 : vector<1x8x128xbf16> to vector<8x128xbf16>
    %cst_33 = arith.constant dense<0.000000e+00> : vector<8x324xf32>
    %45 = tpu.matmul %44, %22, %cst_33 {dimension_numbers = #tpu.dot_dimension_numbers<[1], [0], [0], [1], [0, 0, 1, 1], [], []>} : vector<8x128xbf16>, vector<128x324xbf16>, vector<8x324xf32> -> vector<8x324xf32>
    %c0_34 = arith.constant 0 : index
    %c20 = arith.constant 20 : index
    %46 = vector.load %arg11[%c0_34, %c20] : memref<8x362xf32, #tpu.memory_space<vmem>>, vector<8x324xf32>
    %47 = arith.addf %46, %45 : vector<8x324xf32>
    %c0_35 = arith.constant 0 : index
    %c20_36 = arith.constant 20 : index
    %48 = vector.load %arg11[%c0_35, %c20_36] : memref<8x362xf32, #tpu.memory_space<vmem>>, vector<8x324xf32>
    tpu.vector_store %arg11[%c0_35, %c20_36], %47 {strides = array<i32>} : memref<8x362xf32, #tpu.memory_space<vmem>>, vector<8x324xf32>,
    %c4 = arith.constant 4 : index
    %c0_37 = arith.constant 0 : index
    %c0_38 = arith.constant 0 : index
    %49 = vector.load %arg8[%c4, %c0_37, %c0_38] : memref<9x8x128xbf16, #tpu.memory_space<vmem>>, vector<1x8x128xbf16>
    %50 = vector.shape_cast %49 : vector<1x8x128xbf16> to vector<8x128xbf16>
    %cst_39 = arith.constant dense<0.000000e+00> : vector<8x324xf32>
    %51 = tpu.matmul %50, %22, %cst_39 {dimension_numbers = #tpu.dot_dimension_numbers<[1], [0], [0], [1], [0, 0, 1, 1], [], []>} : vector<8x128xbf16>, vector<128x324xbf16>, vector<8x324xf32> -> vector<8x324xf32>
    %c0_40 = arith.constant 0 : index
    %c19 = arith.constant 19 : index
    %52 = vector.load %arg11[%c0_40, %c19] : memref<8x362xf32, #tpu.memory_space<vmem>>, vector<8x324xf32>
    %53 = arith.addf %52, %51 : vector<8x324xf32>
    %c0_41 = arith.constant 0 : index
    %c19_42 = arith.constant 19 : index
    %54 = vector.load %arg11[%c0_41, %c19_42] : memref<8x362xf32, #tpu.memory_space<vmem>>, vector<8x324xf32>
    tpu.vector_store %arg11[%c0_41, %c19_42], %53 {strides = array<i32>} : memref<8x362xf32, #tpu.memory_space<vmem>>, vector<8x324xf32>,
    %c5 = arith.constant 5 : index
    %c0_43 = arith.constant 0 : index
    %c0_44 = arith.constant 0 : index
    %55 = vector.load %arg8[%c5, %c0_43, %c0_44] : memref<9x8x128xbf16, #tpu.memory_space<vmem>>, vector<1x8x128xbf16>
    %56 = vector.shape_cast %55 : vector<1x8x128xbf16> to vector<8x128xbf16>
    %cst_45 = arith.constant dense<0.000000e+00> : vector<8x324xf32>
    %57 = tpu.matmul %56, %22, %cst_45 {dimension_numbers = #tpu.dot_dimension_numbers<[1], [0], [0], [1], [0, 0, 1, 1], [], []>} : vector<8x128xbf16>, vector<128x324xbf16>, vector<8x324xf32> -> vector<8x324xf32>
    %c0_46 = arith.constant 0 : index
    %c18 = arith.constant 18 : index
    %58 = vector.load %arg11[%c0_46, %c18] : memref<8x362xf32, #tpu.memory_space<vmem>>, vector<8x324xf32>
    %59 = arith.addf %58, %57 : vector<8x324xf32>
    %c0_47 = arith.constant 0 : index
    %c18_48 = arith.constant 18 : index
    %60 = vector.load %arg11[%c0_47, %c18_48] : memref<8x362xf32, #tpu.memory_space<vmem>>, vector<8x324xf32>
    tpu.vector_store %arg11[%c0_47, %c18_48], %59 {strides = array<i32>} : memref<8x362xf32, #tpu.memory_space<vmem>>, vector<8x324xf32>,
    %c6 = arith.constant 6 : index
    %c0_49 = arith.constant 0 : index
    %c0_50 = arith.constant 0 : index
    %61 = vector.load %arg8[%c6, %c0_49, %c0_50] : memref<9x8x128xbf16, #tpu.memory_space<vmem>>, vector<1x8x128xbf16>
    %62 = vector.shape_cast %61 : vector<1x8x128xbf16> to vector<8x128xbf16>
    %cst_51 = arith.constant dense<0.000000e+00> : vector<8x324xf32>
    %63 = tpu.matmul %62, %22, %cst_51 {dimension_numbers = #tpu.dot_dimension_numbers<[1], [0], [0], [1], [0, 0, 1, 1], [], []>} : vector<8x128xbf16>, vector<128x324xbf16>, vector<8x324xf32> -> vector<8x324xf32>
    %c0_52 = arith.constant 0 : index
    %c2_53 = arith.constant 2 : index
    %64 = vector.load %arg11[%c0_52, %c2_53] : memref<8x362xf32, #tpu.memory_space<vmem>>, vector<8x324xf32>
    %65 = arith.addf %64, %63 : vector<8x324xf32>
    %c0_54 = arith.constant 0 : index
    %c2_55 = arith.constant 2 : index
    %66 = vector.load %arg11[%c0_54, %c2_55] : memref<8x362xf32, #tpu.memory_space<vmem>>, vector<8x324xf32>
    tpu.vector_store %arg11[%c0_54, %c2_55], %65 {strides = array<i32>} : memref<8x362xf32, #tpu.memory_space<vmem>>, vector<8x324xf32>,
    %c7 = arith.constant 7 : index
    %c0_56 = arith.constant 0 : index
    %c0_57 = arith.constant 0 : index
    %67 = vector.load %arg8[%c7, %c0_56, %c0_57] : memref<9x8x128xbf16, #tpu.memory_space<vmem>>, vector<1x8x128xbf16>
    %68 = vector.shape_cast %67 : vector<1x8x128xbf16> to vector<8x128xbf16>
    %cst_58 = arith.constant dense<0.000000e+00> : vector<8x324xf32>
    %69 = tpu.matmul %68, %22, %cst_58 {dimension_numbers = #tpu.dot_dimension_numbers<[1], [0], [0], [1], [0, 0, 1, 1], [], []>} : vector<8x128xbf16>, vector<128x324xbf16>, vector<8x324xf32> -> vector<8x324xf32>
    %c0_59 = arith.constant 0 : index
    %c1_60 = arith.constant 1 : index
    %70 = vector.load %arg11[%c0_59, %c1_60] : memref<8x362xf32, #tpu.memory_space<vmem>>, vector<8x324xf32>
    %71 = arith.addf %70, %69 : vector<8x324xf32>
    %c0_61 = arith.constant 0 : index
    %c1_62 = arith.constant 1 : index
    %72 = vector.load %arg11[%c0_61, %c1_62] : memref<8x362xf32, #tpu.memory_space<vmem>>, vector<8x324xf32>
    tpu.vector_store %arg11[%c0_61, %c1_62], %71 {strides = array<i32>} : memref<8x362xf32, #tpu.memory_space<vmem>>, vector<8x324xf32>,
    %c8 = arith.constant 8 : index
    %c0_63 = arith.constant 0 : index
    %c0_64 = arith.constant 0 : index
    %73 = vector.load %arg8[%c8, %c0_63, %c0_64] : memref<9x8x128xbf16, #tpu.memory_space<vmem>>, vector<1x8x128xbf16>
    %74 = vector.shape_cast %73 : vector<1x8x128xbf16> to vector<8x128xbf16>
    %cst_65 = arith.constant dense<0.000000e+00> : vector<8x324xf32>
    %75 = tpu.matmul %74, %22, %cst_65 {dimension_numbers = #tpu.dot_dimension_numbers<[1], [0], [0], [1], [0, 0, 1, 1], [], []>} : vector<8x128xbf16>, vector<128x324xbf16>, vector<8x324xf32> -> vector<8x324xf32>
    %c0_66 = arith.constant 0 : index
    %c0_67 = arith.constant 0 : index
    %76 = vector.load %arg11[%c0_66, %c0_67] : memref<8x362xf32, #tpu.memory_space<vmem>>, vector<8x324xf32>
    %77 = arith.addf %76, %75 : vector<8x324xf32>
    %c0_68 = arith.constant 0 : index
    %c0_69 = arith.constant 0 : index
    %78 = vector.load %arg11[%c0_68, %c0_69] : memref<8x362xf32, #tpu.memory_space<vmem>>, vector<8x324xf32>
    tpu.vector_store %arg11[%c0_68, %c0_69], %77 {strides = array<i32>} : memref<8x362xf32, #tpu.memory_space<vmem>>, vector<8x324xf32>,
    %c0_70 = arith.constant 0 : index
    %c0_71 = arith.constant 0 : index
    %c0_72 = arith.constant 0 : index
    %79 = vector.load %arg1[%c0_70, %c0_71, %c0_72] : memref<1x4x256xf32, #tpu.memory_space<vmem>>, vector<1x4x256xf32>
    %80 = vector.shape_cast %79 : vector<1x4x256xf32> to vector<4x256xf32>
    %c0_73 = arith.constant 0 : index
    %c0_74 = arith.constant 0 : index
    %81 = vector.load %arg3[%c0_73, %c0_74] : memref<4x1xf32, #tpu.memory_space<vmem>>, vector<4x1xf32>
    %c0_75 = arith.constant 0 : index
    %c0_76 = arith.constant 0 : index
    %c0_77 = arith.constant 0 : index
    %82 = vector.load %arg2[%c0_75, %c0_76, %c0_77] : memref<1x1x256xf32, #tpu.memory_space<vmem>>, vector<1x1x256xf32>
    %83 = vector.shape_cast %82 : vector<1x1x256xf32> to vector<1x256xf32>
    %84 = vector.broadcast %81 : vector<4x1xf32> to vector<4x256xf32>
    %85 = vector.broadcast %83 : vector<1x256xf32> to vector<4x256xf32>
    %86 = arith.mulf %84, %85 : vector<4x256xf32>
    %87 = arith.addf %80, %86 : vector<4x256xf32>
    %cst_78 = arith.constant dense<0.000000e+00> : vector<4xf32>
    %88 = vector.multi_reduction <add>, %87, %cst_78 [1] : vector<4x256xf32> to vector<4xf32>
    %89 = vector.shape_cast %88 : vector<4xf32> to vector<4x1xf32>
    %90 = arith.mulf %87, %87 : vector<4x256xf32>
    %cst_79 = arith.constant dense<0.000000e+00> : vector<4xf32>
    %91 = vector.multi_reduction <add>, %90, %cst_79 [1] : vector<4x256xf32> to vector<4xf32>
    %92 = vector.shape_cast %91 : vector<4xf32> to vector<4x1xf32>
    %cst_80 = arith.constant 3.906250e-03 : f32
    %93 = vector.broadcast %cst_80 : f32 to vector<4x1xf32>
    %94 = arith.mulf %89, %93 : vector<4x1xf32>
    %cst_81 = arith.constant 3.906250e-03 : f32
    %95 = vector.broadcast %cst_81 : f32 to vector<4x1xf32>
    %96 = arith.mulf %92, %95 : vector<4x1xf32>
    %97 = arith.mulf %94, %94 : vector<4x1xf32>
    %98 = arith.subf %96, %97 : vector<4x1xf32>
    %cst_82 = arith.constant 0.000000e+00 : f32
    %99 = vector.broadcast %cst_82 : f32 to vector<4x1xf32>
    %100 = arith.maximumf %98, %99 : vector<4x1xf32>
    %101 = vector.broadcast %94 : vector<4x1xf32> to vector<4x256xf32>
    %102 = arith.subf %87, %101 : vector<4x256xf32>
    %cst_83 = arith.constant 9.99999974E-6 : f32
    %103 = vector.broadcast %cst_83 : f32 to vector<4x1xf32>
    %104 = arith.addf %100, %103 : vector<4x1xf32>
    %105 = math.rsqrt %104 : vector<4x1xf32>
    %106 = vector.broadcast %105 : vector<4x1xf32> to vector<4x256xf32>
    %107 = arith.mulf %102, %106 : vector<4x256xf32>
    %c0_84 = arith.constant 0 : index
    %c38_85 = arith.constant 38 : index
    %108 = vector.load %arg11[%c0_84, %c38_85] : memref<8x362xf32, #tpu.memory_space<vmem>>, vector<8x16xf32>
    %c0_86 = arith.constant 0 : index
    %c56 = arith.constant 56 : index
    %109 = vector.load %arg11[%c0_86, %c56] : memref<8x362xf32, #tpu.memory_space<vmem>>, vector<8x16xf32>
    %c0_87 = arith.constant 0 : index
    %c74 = arith.constant 74 : index
    %110 = vector.load %arg11[%c0_87, %c74] : memref<8x362xf32, #tpu.memory_space<vmem>>, vector<8x16xf32>
    %c0_88 = arith.constant 0 : index
    %c92 = arith.constant 92 : index
    %111 = vector.load %arg11[%c0_88, %c92] : memref<8x362xf32, #tpu.memory_space<vmem>>, vector<8x16xf32>
    %c0_89 = arith.constant 0 : index
    %c110 = arith.constant 110 : index
    %112 = vector.load %arg11[%c0_89, %c110] : memref<8x362xf32, #tpu.memory_space<vmem>>, vector<8x16xf32>
    %c0_90 = arith.constant 0 : index
    %c128 = arith.constant 128 : index
    %113 = vector.load %arg11[%c0_90, %c128] : memref<8x362xf32, #tpu.memory_space<vmem>>, vector<8x16xf32>
    %c0_91 = arith.constant 0 : index
    %c146 = arith.constant 146 : index
    %114 = vector.load %arg11[%c0_91, %c146] : memref<8x362xf32, #tpu.memory_space<vmem>>, vector<8x16xf32>
    %c0_92 = arith.constant 0 : index
    %c164 = arith.constant 164 : index
    %115 = vector.load %arg11[%c0_92, %c164] : memref<8x362xf32, #tpu.memory_space<vmem>>, vector<8x16xf32>
    %c0_93 = arith.constant 0 : index
    %c182 = arith.constant 182 : index
    %116 = vector.load %arg11[%c0_93, %c182] : memref<8x362xf32, #tpu.memory_space<vmem>>, vector<8x16xf32>
    %c0_94 = arith.constant 0 : index
    %c200 = arith.constant 200 : index
    %117 = vector.load %arg11[%c0_94, %c200] : memref<8x362xf32, #tpu.memory_space<vmem>>, vector<8x16xf32>
    %c0_95 = arith.constant 0 : index
    %c218 = arith.constant 218 : index
    %118 = vector.load %arg11[%c0_95, %c218] : memref<8x362xf32, #tpu.memory_space<vmem>>, vector<8x16xf32>
    %c0_96 = arith.constant 0 : index
    %c236 = arith.constant 236 : index
    %119 = vector.load %arg11[%c0_96, %c236] : memref<8x362xf32, #tpu.memory_space<vmem>>, vector<8x16xf32>
    %c0_97 = arith.constant 0 : index
    %c254 = arith.constant 254 : index
    %120 = vector.load %arg11[%c0_97, %c254] : memref<8x362xf32, #tpu.memory_space<vmem>>, vector<8x16xf32>
    %c0_98 = arith.constant 0 : index
    %c272 = arith.constant 272 : index
    %121 = vector.load %arg11[%c0_98, %c272] : memref<8x362xf32, #tpu.memory_space<vmem>>, vector<8x16xf32>
    %c0_99 = arith.constant 0 : index
    %c290 = arith.constant 290 : index
    %122 = vector.load %arg11[%c0_99, %c290] : memref<8x362xf32, #tpu.memory_space<vmem>>, vector<8x16xf32>
    %c0_100 = arith.constant 0 : index
    %c308 = arith.constant 308 : index
    %123 = vector.load %arg11[%c0_100, %c308] : memref<8x362xf32, #tpu.memory_space<vmem>>, vector<8x16xf32>
    %124 = tpu.concatenate %108, %109, %110, %111, %112, %113, %114, %115, %116, %117, %118, %119, %120, %121, %122, %123 in 1 : vector<8x16xf32>, vector<8x16xf32>, vector<8x16xf32>, vector<8x16xf32>, vector<8x16xf32>, vector<8x16xf32>, vector<8x16xf32>, vector<8x16xf32>, vector<8x16xf32>, vector<8x16xf32>, vector<8x16xf32>, vector<8x16xf32>, vector<8x16xf32>, vector<8x16xf32>, vector<8x16xf32>, vector<8x16xf32> -> vector<8x256xf32>
    %c0_101 = arith.constant 0 : index
    %c0_102 = arith.constant 0 : index
    %125 = vector.load %arg9[%c0_101, %c0_102] : memref<8x1xf32, #tpu.memory_space<vmem>>, vector<8x1xf32>
    %126 = vector.broadcast %125 : vector<8x1xf32> to vector<8x256xf32>
    %127 = arith.addf %124, %126 : vector<8x256xf32>
    %128 = vector.extract_strided_slice %127 {offsets = [0, 0], sizes = [4, 256], strides = [1, 1]} : vector<8x256xf32> to vector<4x256xf32>
    %129 = vector.extract_strided_slice %127 {offsets = [4, 0], sizes = [4, 256], strides = [1, 1]} : vector<8x256xf32> to vector<4x256xf32>
    %cst_103 = arith.constant 1.000000e+00 : f32
    %130 = vector.broadcast %cst_103 : f32 to vector<4x256xf32>
    %131 = arith.addf %130, %128 : vector<4x256xf32>
    %132 = arith.mulf %107, %131 : vector<4x256xf32>
    %133 = arith.addf %132, %129 : vector<4x256xf32>
    %c0_104 = arith.constant 0 : index
    %c0_105 = arith.constant 0 : index
    %c0_106 = arith.constant 0 : index
    %134 = vector.load %arg10[%c0_104, %c0_105, %c0_106] : memref<1x4x256xf32, #tpu.memory_space<vmem>>, vector<1x4x256xf32>
    %135 = vector.shape_cast %134 : vector<1x4x256xf32> to vector<4x256xf32>
    %136 = vector.shape_cast %133 : vector<4x256xf32> to vector<1x4x256xf32>
    tpu.vector_store %arg10[%c0_104, %c0_105, %c0_106], %136 {strides = array<i32>} : memref<1x4x256xf32, #tpu.memory_space<vmem>>, vector<1x4x256xf32>,
    return
  }
  func.func @transform_0(%arg0: i32) -> (i32, i32, i32) {
    %c0_i32 = arith.constant 0 : i32
    %c0_i32_0 = arith.constant 0 : i32
    %c0_i32_1 = arith.constant 0 : i32
    return %arg0, %c0_i32, %c0_i32_0 : i32, i32, i32
  }
  func.func @transform_1(%arg0: i32) -> (i32, i32, i32) {
    %c0_i32 = arith.constant 0 : i32
    %c0_i32_0 = arith.constant 0 : i32
    %c0_i32_1 = arith.constant 0 : i32
    return %arg0, %c0_i32, %c0_i32_0 : i32, i32, i32
  }
  func.func @transform_2(%arg0: i32) -> (i32, i32) {
    %c0_i32 = arith.constant 0 : i32
    %c0_i32_0 = arith.constant 0 : i32
    %c0_i32_1 = arith.constant 0 : i32
    return %c0_i32, %c0_i32_0 : i32, i32
  }
  func.func @transform_3(%arg0: i32) -> (i32, i32, i32) {
    %c0_i32 = arith.constant 0 : i32
    %c0_i32_0 = arith.constant 0 : i32
    %c0_i32_1 = arith.constant 0 : i32
    return %arg0, %c0_i32, %c0_i32_0 : i32, i32, i32
  }
  func.func @transform_4(%arg0: i32) -> (i32, i32) {
    %c0_i32 = arith.constant 0 : i32
    %c0_i32_0 = arith.constant 0 : i32
    %c0_i32_1 = arith.constant 0 : i32
    return %c0_i32, %c0_i32_0 : i32, i32
  }
  func.func @transform_5(%arg0: i32) -> (i32, i32) {
    %c0_i32 = arith.constant 0 : i32
    %c0_i32_0 = arith.constant 0 : i32
    %c0_i32_1 = arith.constant 0 : i32
    return %c0_i32, %c0_i32_0 : i32, i32
  }
  func.func @transform_6(%arg0: i32) -> (i32, i32) {
    %c0_i32 = arith.constant 0 : i32
    %c0_i32_0 = arith.constant 0 : i32
    %c0_i32_1 = arith.constant 0 : i32
    return %c0_i32, %c0_i32_0 : i32, i32
  }
  func.func @transform_7(%arg0: i32) -> (i32, i32, i32) {
    %c0_i32 = arith.constant 0 : i32
    %c0_i32_0 = arith.constant 0 : i32
    %c0_i32_1 = arith.constant 0 : i32
    %c0_i32_2 = arith.constant 0 : i32
    return %c0_i32, %c0_i32_0, %c0_i32_1 : i32, i32, i32
  }
  func.func @transform_8(%arg0: i32) -> (i32, i32) {
    %c0_i32 = arith.constant 0 : i32
    %c0_i32_0 = arith.constant 0 : i32
    %c0_i32_1 = arith.constant 0 : i32
    return %c0_i32, %c0_i32_0 : i32, i32
  }
  func.func @transform_9(%arg0: i32) -> (i32, i32, i32) {
    %c0_i32 = arith.constant 0 : i32
    %c0_i32_0 = arith.constant 0 : i32
    %c0_i32_1 = arith.constant 0 : i32
    return %arg0, %c0_i32, %c0_i32_0 : i32, i32, i32
  }
}

</mosaic_0001>

<llo_original>
// kernel: tpu_custom_call.1
$region0: #{tpu_custom_call.1}
  #allocation0 [shape = 'u32[]', space=smem, size = 0x4, offset = 0x4, fixed_abs, tag = 'smem constant byte address 0x4 - core index']
  #allocation1 [shape = 'u32[144,128]{1,0:T(1,128)}', space=vmem, size = 0x12000, scoped, tag = 'internal scratch']
  #allocation2 [shape = 'f32[8,362]{1,0:T(8,128)}', space=vmem, size = 0x3000, scoped, tag = 'scratch operand']
  %s0 = inlined_call_operand.vmem [shape: f32[2,4,256], index: 0, kind: input, shape index: {}]
  %s1 = inlined_call_operand.vmem [shape: f32[2,1,256], index: 1, kind: input, shape index: {}]
  %s2 = inlined_call_operand.vmem [shape: f32[4,1], index: 2, kind: input, shape index: {}]
  %s3 = inlined_call_operand.vmem [shape: bf16[2,8,362], index: 3, kind: input, shape index: {}]
  %s4 = inlined_call_operand.vmem [shape: f32[1,324], index: 4, kind: input, shape index: {}]
  %s5 = inlined_call_operand.vmem [shape: bf16[128,72], index: 5, kind: input, shape index: {}]
  %s6 = inlined_call_operand.vmem [shape: f32[128,1], index: 6, kind: input, shape index: {}]
  %s7 = inlined_call_operand.vmem [shape: bf16[9,8,128], index: 7, kind: input, shape index: {}]
  %s8 = inlined_call_operand.vmem [shape: f32[8,1], index: 8, kind: input, shape index: {}]
  %s9 = inlined_call_operand.hbm [shape: f32[2,4,256], index: 9, kind: output, shape index: {}]
  %s10 = sld [smem:[#allocation0]]
  $region69: #{tpu_custom_call.1} parent=0
    _
  %s12 = ssub.s32 1, %s10
  %s13 = scalar_select 0, %s12, %s10
  $region1: #{tpu_custom_call.1} parent=0
    #allocation3 [shape = 'u8[8192]{0}', space=vmem, size = 0x2000, scoped, tag = 'output window, operand 0']
    #allocation4 [shape = 's32[2]{0}', space=sflag, size = 0x8, scoped, tag = 'scoped memory for tpu_custom_call.1']
    %14 = vsyncpa [#allocation4], 0
    %s15 = scalar_lea.sflag [#allocation4], 1
    %16 = vsyncpa %s15, 0
    loop: start=0, step=1, limit=4
    $region2: #{tpu_custom_call.1} parent=1 // loop_pre_header
      _
    $region3: #{tpu_custom_call.1} parent=1 // loop_header
      %s18 = sphi 0, %s22
      %p19 = scmp.ge.s32.totalorder %s18, 4
      %s28 = sphi 0, %s30
      %s31 = sphi 0, %s28
      %s32 = sphi 0, %s31
      %s48 = sphi 0, %s32
      %s54 = sphi 0, %s56
      %s57 = sphi 0, %s54
      %s58 = sphi 0, %s57
      %s74 = sphi 0, %s58
      %s78 = sphi 0, %s78
      %s80 = sphi 0, %s78
      %s81 = sphi 0, %s80
      %s95 = sphi 0, %s81
      %s101 = sphi 0, %s103
      %s104 = sphi 0, %s101
      %s105 = sphi 0, %s104
      %s121 = sphi 0, %s105
      %s125 = sphi 0, %s125
      %s127 = sphi 0, %s125
      %s128 = sphi 0, %s127
      %s142 = sphi 0, %s128
      %s146 = sphi 0, %s146
      %s148 = sphi 0, %s146
      %s149 = sphi 0, %s148
      %s163 = sphi 0, %s149
      %s167 = sphi 0, %s167
      %s169 = sphi 0, %s167
      %s170 = sphi 0, %s169
      %s184 = sphi 0, %s170
      %s188 = sphi 0, %s188
      %s190 = sphi 0, %s188
      %s191 = sphi 0, %s190
      %s205 = sphi 0, %s191
      %s209 = sphi 0, %s209
      %s211 = sphi 0, %s209
      %s212 = sphi 0, %s211
      %s226 = sphi 0, %s212
      %s232 = sphi 0, %s234
      %s235 = sphi 0, %s232
      %s236 = sphi 0, %s235
      %s252 = sphi 0, %s236
    $region4: #{tpu_custom_call.1} parent=1 // loop_header_branch
      %21 = sbr.rel (%p19) target = $region8
    $region5: #{tpu_custom_call.1} parent=1 // loop_body
      %s23 = ssub.s32 %s18, 1
      %s24 = ssub.s32 %s18, 2
      %s25 = sadd.s32 %s18, 1
      %s26 = ssub.s32 %s18, %s25
      %p27 = scmp.eq.s32.totalorder %s26, 0
      %s29 = sadd.s32 %s28, 1
      %s30 = scalar_select %p27, %s28, %s29
      %p33 = pneg %p27
      %p34 = scmp.eq.s32.totalorder %s18, 1
      %p35 = por %p33, %p34
      %p36 = scmp.ne.s32.totalorder %s28, %s31
      %p37 = scmp.eq.s32.totalorder %s18, 0
      %p38 = por %p36, %p37
      %p39 = scmp.ne.s32.totalorder %s28, %s31
      %p40 = scmp.eq.s32.totalorder %s23, 1
      %p41 = por %p39, %p40
      %p42 = scmp.ne.s32.totalorder %s31, %s32
      %p43 = scmp.eq.s32.totalorder %s23, 0
      %p44 = por %p42, %p43
      %p45 = scmp.ne.s32.totalorder %s31, %s32
      %p46 = scmp.eq.s32.totalorder %s24, 1
      %p47 = por %p45, %p46
      %p49 = scmp.ne.s32.totalorder %s32, %s48
      %p50 = scmp.eq.s32.totalorder %s24, 0
      %p51 = por %p49, %p50
      %s52 = ssub.s32 %s18, %s25
      %p53 = scmp.eq.s32.totalorder %s52, 0
      %s55 = sadd.s32 %s54, 1
      %s56 = scalar_select %p53, %s54, %s55
      %p59 = pneg %p53
      %p60 = scmp.eq.s32.totalorder %s18, 1
      %p61 = por %p59, %p60
      %p62 = scmp.ne.s32.totalorder %s54, %s57
      %p63 = scmp.eq.s32.totalorder %s18, 0
      %p64 = por %p62, %p63
      %p65 = scmp.ne.s32.totalorder %s54, %s57
      %p66 = scmp.eq.s32.totalorder %s23, 1
      %p67 = por %p65, %p66
      %p68 = scmp.ne.s32.totalorder %s57, %s58
      %p69 = scmp.eq.s32.totalorder %s23, 0
      %p70 = por %p68, %p69
      %p71 = scmp.ne.s32.totalorder %s57, %s58
      %p72 = scmp.eq.s32.totalorder %s24, 1
      %p73 = por %p71, %p72
      %p75 = scmp.ne.s32.totalorder %s58, %s74
      %p76 = scmp.eq.s32.totalorder %s24, 0
      %p77 = por %p75, %p76
      %s79 = sadd.s32 %s78, 1
      %p82 = scmp.eq.s32.totalorder %s18, 1
      %p83 = scmp.ne.s32.totalorder %s78, %s80
      %p84 = scmp.eq.s32.totalorder %s18, 0
      %p85 = por %p83, %p84
      %p86 = scmp.ne.s32.totalorder %s78, %s80
      %p87 = scmp.eq.s32.totalorder %s23, 1
      %p88 = por %p86, %p87
      %p89 = scmp.ne.s32.totalorder %s80, %s81
      %p90 = scmp.eq.s32.totalorder %s23, 0
      %p91 = por %p89, %p90
      %p92 = scmp.ne.s32.totalorder %s80, %s81
      %p93 = scmp.eq.s32.totalorder %s24, 1
      %p94 = por %p92, %p93
      %p96 = scmp.ne.s32.totalorder %s81, %s95
      %p97 = scmp.eq.s32.totalorder %s24, 0
      %p98 = por %p96, %p97
      %s99 = ssub.s32 %s18, %s25
      %p100 = scmp.eq.s32.totalorder %s99, 0
      %s102 = sadd.s32 %s101, 1
      %s103 = scalar_select %p100, %s101, %s102
      %p106 = pneg %p100
      %p107 = scmp.eq.s32.totalorder %s18, 1
      %p108 = por %p106, %p107
      %p109 = scmp.ne.s32.totalorder %s101, %s104
      %p110 = scmp.eq.s32.totalorder %s18, 0
      %p111 = por %p109, %p110
      %p112 = scmp.ne.s32.totalorder %s101, %s104
      %p113 = scmp.eq.s32.totalorder %s23, 1
      %p114 = por %p112, %p113
      %p115 = scmp.ne.s32.totalorder %s104, %s105
      %p116 = scmp.eq.s32.totalorder %s23, 0
      %p117 = por %p115, %p116
      %p118 = scmp.ne.s32.totalorder %s104, %s105
      %p119 = scmp.eq.s32.totalorder %s24, 1
      %p120 = por %p118, %p119
      %p122 = scmp.ne.s32.totalorder %s105, %s121
      %p123 = scmp.eq.s32.totalorder %s24, 0
      %p124 = por %p122, %p123
      %s126 = sadd.s32 %s125, 1
      %p129 = scmp.eq.s32.totalorder %s18, 1
      %p130 = scmp.ne.s32.totalorder %s125, %s127
      %p131 = scmp.eq.s32.totalorder %s18, 0
      %p132 = por %p130, %p131
      %p133 = scmp.ne.s32.totalorder %s125, %s127
      %p134 = scmp.eq.s32.totalorder %s23, 1
      %p135 = por %p133, %p134
      %p136 = scmp.ne.s32.totalorder %s127, %s128
      %p137 = scmp.eq.s32.totalorder %s23, 0
      %p138 = por %p136, %p137
      %p139 = scmp.ne.s32.totalorder %s127, %s128
      %p140 = scmp.eq.s32.totalorder %s24, 1
      %p141 = por %p139, %p140
      %p143 = scmp.ne.s32.totalorder %s128, %s142
      %p144 = scmp.eq.s32.totalorder %s24, 0
      %p145 = por %p143, %p144
      %s147 = sadd.s32 %s146, 1
      %p150 = scmp.eq.s32.totalorder %s18, 1
      %p151 = scmp.ne.s32.totalorder %s146, %s148
      %p152 = scmp.eq.s32.totalorder %s18, 0
      %p153 = por %p151, %p152
      %p154 = scmp.ne.s32.totalorder %s146, %s148
      %p155 = scmp.eq.s32.totalorder %s23, 1
      %p156 = por %p154, %p155
      %p157 = scmp.ne.s32.totalorder %s148, %s149
      %p158 = scmp.eq.s32.totalorder %s23, 0
      %p159 = por %p157, %p158
      %p160 = scmp.ne.s32.totalorder %s148, %s149
      %p161 = scmp.eq.s32.totalorder %s24, 1
      %p162 = por %p160, %p161
      %p164 = scmp.ne.s32.totalorder %s149, %s163
      %p165 = scmp.eq.s32.totalorder %s24, 0
      %p166 = por %p164, %p165
      %s168 = sadd.s32 %s167, 1
      %p171 = scmp.eq.s32.totalorder %s18, 1
      %p172 = scmp.ne.s32.totalorder %s167, %s169
      %p173 = scmp.eq.s32.totalorder %s18, 0
      %p174 = por %p172, %p173
      %p175 = scmp.ne.s32.totalorder %s167, %s169
      %p176 = scmp.eq.s32.totalorder %s23, 1
      %p177 = por %p175, %p176
      %p178 = scmp.ne.s32.totalorder %s169, %s170
      %p179 = scmp.eq.s32.totalorder %s23, 0
      %p180 = por %p178, %p179
      %p181 = scmp.ne.s32.totalorder %s169, %s170
      %p182 = scmp.eq.s32.totalorder %s24, 1
      %p183 = por %p181, %p182
      %p185 = scmp.ne.s32.totalorder %s170, %s184
      %p186 = scmp.eq.s32.totalorder %s24, 0
      %p187 = por %p185, %p186
      %s189 = sadd.s32 %s188, 1
      %p192 = scmp.eq.s32.totalorder %s18, 1
      %p193 = scmp.ne.s32.totalorder %s188, %s190
      %p194 = scmp.eq.s32.totalorder %s18, 0
      %p195 = por %p193, %p194
      %p196 = scmp.ne.s32.totalorder %s188, %s190
      %p197 = scmp.eq.s32.totalorder %s23, 1
      %p198 = por %p196, %p197
      %p199 = scmp.ne.s32.totalorder %s190, %s191
      %p200 = scmp.eq.s32.totalorder %s23, 0
      %p201 = por %p199, %p200
      %p202 = scmp.ne.s32.totalorder %s190, %s191
      %p203 = scmp.eq.s32.totalorder %s24, 1
      %p204 = por %p202, %p203
      %p206 = scmp.ne.s32.totalorder %s191, %s205
      %p207 = scmp.eq.s32.totalorder %s24, 0
      %p208 = por %p206, %p207
      %s210 = sadd.s32 %s209, 1
      %p213 = scmp.eq.s32.totalorder %s18, 1
      %p214 = scmp.ne.s32.totalorder %s209, %s211
      %p215 = scmp.eq.s32.totalorder %s18, 0
      %p216 = por %p214, %p215
      %p217 = scmp.ne.s32.totalorder %s209, %s211
      %p218 = scmp.eq.s32.totalorder %s23, 1
      %p219 = por %p217, %p218
      %p220 = scmp.ne.s32.totalorder %s211, %s212
      %p221 = scmp.eq.s32.totalorder %s23, 0
      %p222 = por %p220, %p221
      %p223 = scmp.ne.s32.totalorder %s211, %s212
      %p224 = scmp.eq.s32.totalorder %s24, 1
      %p225 = por %p223, %p224
      %p227 = scmp.ne.s32.totalorder %s212, %s226
      %p228 = scmp.eq.s32.totalorder %s24, 0
      %p229 = por %p227, %p228
      %s230 = ssub.s32 %s18, %s25
      %p231 = scmp.eq.s32.totalorder %s230, 0
      %s233 = sadd.s32 %s232, 1
      %s234 = scalar_select %p231, %s232, %s233
      %p237 = pneg %p231
      %p238 = scmp.eq.s32.totalorder %s18, 1
      %p239 = por %p237, %p238
      %p240 = scmp.ne.s32.totalorder %s232, %s235
      %p241 = scmp.eq.s32.totalorder %s18, 0
      %p242 = por %p240, %p241
      %p243 = scmp.ne.s32.totalorder %s232, %s235
      %p244 = scmp.eq.s32.totalorder %s23, 1
      %p245 = por %p243, %p244
      %p246 = scmp.ne.s32.totalorder %s235, %s236
      %p247 = scmp.eq.s32.totalorder %s23, 0
      %p248 = por %p246, %p247
      %p249 = scmp.ne.s32.totalorder %s235, %s236
      %p250 = scmp.eq.s32.totalorder %s24, 1
      %p251 = por %p249, %p250
      %p253 = scmp.ne.s32.totalorder %s236, %s252
      %p254 = scmp.eq.s32.totalorder %s24, 0
      %p255 = por %p253, %p254
      %p256 = scmp.le.s32.totalorder 1, %s18
      %p257 = scmp.lt.s32.totalorder %s18, 3
      %p258 = pnand %p256, %p257
      %p259 = pneg %p258
      // Predicated region
      $region9: #{tpu_custom_call.1} parent=5 // pred_check
        _
      $region10: #{tpu_custom_call.1} parent=5 // pred_check_branch
        %261 = sbr.rel (%p258) target = $region12
      $region11: #{tpu_custom_call.1} parent=5 // pred_region
        %s262 = ssub.s32 %s18, 1
        // Predicated region
        $region13: #{tpu_custom_call.1} parent=11 // pred_check
          %p263 = pneg %p91
        $region14: #{tpu_custom_call.1} parent=11 // pred_check_branch
          %265 = sbr.rel (%p263) target = $region16
        $region15: #{tpu_custom_call.1} parent=11 // pred_region
          _
        $region16: #{tpu_custom_call.1} parent=11 // pred_fallthru
          _
        // Predicated region
        $region17: #{tpu_custom_call.1} parent=11 // pred_check
          %p266 = pneg %p138
        $region18: #{tpu_custom_call.1} parent=11 // pred_check_branch
          %268 = sbr.rel (%p266) target = $region20
        $region19: #{tpu_custom_call.1} parent=11 // pred_region
          _
        $region20: #{tpu_custom_call.1} parent=11 // pred_fallthru
          _
        // Predicated region
        $region21: #{tpu_custom_call.1} parent=11 // pred_check
          %p269 = pneg %p159
        $region22: #{tpu_custom_call.1} parent=11 // pred_check_branch
          %271 = sbr.rel (%p269) target = $region24
        $region23: #{tpu_custom_call.1} parent=11 // pred_region
          _
        $region24: #{tpu_custom_call.1} parent=11 // pred_fallthru
          _
        // Predicated region
        $region25: #{tpu_custom_call.1} parent=11 // pred_check
          %p272 = pneg %p180
        $region26: #{tpu_custom_call.1} parent=11 // pred_check_branch
          %274 = sbr.rel (%p272) target = $region28
        $region27: #{tpu_custom_call.1} parent=11 // pred_region
          _
        $region28: #{tpu_custom_call.1} parent=11 // pred_fallthru
          _
        // Predicated region
        $region29: #{tpu_custom_call.1} parent=11 // pred_check
          %p275 = pneg %p201
        $region30: #{tpu_custom_call.1} parent=11 // pred_check_branch
          %277 = sbr.rel (%p275) target = $region32
        $region31: #{tpu_custom_call.1} parent=11 // pred_region
          _
        $region32: #{tpu_custom_call.1} parent=11 // pred_fallthru
          _
        // Predicated region
        $region33: #{tpu_custom_call.1} parent=11 // pred_check
          %p278 = pneg %p222
        $region34: #{tpu_custom_call.1} parent=11 // pred_check_branch
          %280 = sbr.rel (%p278) target = $region36
        $region35: #{tpu_custom_call.1} parent=11 // pred_region
          _
        $region36: #{tpu_custom_call.1} parent=11 // pred_fallthru
          _
      $region12: #{tpu_custom_call.1} parent=5 // pred_fallthru
        _
      %p281 = scmp.lt.s32.totalorder %s18, 2
      // Predicated region
      $region37: #{tpu_custom_call.1} parent=5 // pred_check
        %p282 = pneg %p281
      $region38: #{tpu_custom_call.1} parent=5 // pred_check_branch
        %284 = sbr.rel (%p282) target = $region40
      $region39: #{tpu_custom_call.1} parent=5 // pred_region
        // Predicated region
        $region41: #{tpu_custom_call.1} parent=39 // pred_check
          %p285 = pneg %p38
        $region42: #{tpu_custom_call.1} parent=39 // pred_check_branch
          %287 = sbr.rel (%p285) target = $region44
        $region43: #{tpu_custom_call.1} parent=39 // pred_region
          %p288 = scmp.lt.s32.totalorder %s18, 1
          %s289 = scalar_select %p288, %s18, 1
          %s290 = smul.addr %s289, 2
          %s291 = smul.addr %s290, 4
          %s292 = scalar_lea.vmem %s0, %s291
        $region44: #{tpu_custom_call.1} parent=39 // pred_fallthru
          _
        // Predicated region
        $region45: #{tpu_custom_call.1} parent=39 // pred_check
          %p293 = pneg %p64
        $region46: #{tpu_custom_call.1} parent=39 // pred_check_branch
          %295 = sbr.rel (%p293) target = $region48
        $region47: #{tpu_custom_call.1} parent=39 // pred_region
          %p296 = scmp.lt.s32.totalorder %s18, 1
          %s297 = scalar_select %p296, %s18, 1
          %s298 = smul.addr %s297, 2
          %s299 = scalar_lea.vmem %s1, %s298
        $region48: #{tpu_custom_call.1} parent=39 // pred_fallthru
          _
        // Predicated region
        $region49: #{tpu_custom_call.1} parent=39 // pred_check
          %p300 = pneg %p111
        $region50: #{tpu_custom_call.1} parent=39 // pred_check_branch
          %302 = sbr.rel (%p300) target = $region52
        $region51: #{tpu_custom_call.1} parent=39 // pred_region
          %p303 = scmp.lt.s32.totalorder %s18, 1
          %s304 = scalar_select %p303, %s18, 1
          %s305 = smul.addr %s304, 3
          %s306 = smul.addr %s305, 4
          %s307 = scalar_lea.vmem %s3, %s306
        $region52: #{tpu_custom_call.1} parent=39 // pred_fallthru
          _
      $region40: #{tpu_custom_call.1} parent=5 // pred_fallthru
        _
      %p308 = scmp.le.s32.totalorder 1, %s18
      %p309 = scmp.lt.s32.totalorder %s18, 3
      %p310 = pnand %p308, %p309
      %p311 = pneg %p310
      // Predicated region
      $region53: #{tpu_custom_call.1} parent=5 // pred_check
        _
      $region54: #{tpu_custom_call.1} parent=5 // pred_check_branch
        %313 = sbr.rel (%p310) target = $region56
      $region55: #{tpu_custom_call.1} parent=5 // pred_region
        %s314 = ssub.s32 %s18, 1
        %p315 = scmp.lt.s32.totalorder %s23, 1
        %s316 = scalar_select %p315, %s23, 1
        %s317 = smul.addr %s316, 2
        %s318 = smul.addr %s317, 4
        %s319 = scalar_lea.vmem %s0, %s318
        %p320 = pneg %p44
        %p321 = pneg %p41
        %p322 = scmp.lt.s32.totalorder %s23, 1
        %s323 = scalar_select %p322, %s23, 1
        %s324 = smul.addr %s323, 2
        %s325 = scalar_lea.vmem %s1, %s324
        %p326 = pneg %p70
        %p327 = pneg %p67
        %p328 = pneg %p91
        %p329 = pneg %p88
        %p330 = scmp.lt.s32.totalorder %s23, 1
        %s331 = scalar_select %p330, %s23, 1
        %s332 = smul.addr %s331, 3
        %s333 = smul.addr %s332, 4
        %s334 = scalar_lea.vmem %s3, %s333
        %p335 = pneg %p117
        %p336 = pneg %p114
        %p337 = pneg %p138
        %p338 = pneg %p135
        %p339 = pneg %p159
        %p340 = pneg %p156
        %p341 = pneg %p180
        %p342 = pneg %p177
        %p343 = pneg %p201
        %p344 = pneg %p198
        %p345 = pneg %p222
        %p346 = pneg %p219
        %p347 = pneg %p248
        %p348 = pneg %p245
        %s349 = sand.u32 %s235, 1
        %s350 = scalar_lea.sflag [#allocation4], %s349
        %s351 = sand.u32 %s235, 1
        %s352 = smul.addr %s351, 8
        %s353 = scalar_lea.vmem [#allocation3], %s352
        %p354 = scmp.lt.s32.totalorder %s23, 1
        %s355 = scalar_select %p354, %s23, 1
        %s356 = smul.addr %s355, 2
        %s357 = smul.addr %s356, 4
        %s358 = scalar_lea.vmem %s0, %s357
        %p359 = scmp.lt.s32.totalorder %s23, 1
        %s360 = scalar_select %p359, %s23, 1
        %s361 = smul.addr %s360, 2
        %s362 = scalar_lea.vmem %s1, %s361
        %p363 = scmp.lt.s32.totalorder %s23, 1
        %s364 = scalar_select %p363, %s23, 1
        %s365 = smul.addr %s364, 3
        %s366 = smul.addr %s365, 4
        %s367 = scalar_lea.vmem %s3, %s366
        %v369 = vld [vmem:[%s367] sm:$0xff]
        %v370 = vld [vmem:[%s367 + $0x8] sm:$0xf]
        %v373 = vunpack.c.l.b16 %v369
        %v374 = vunpack.c.h.b16 %v369
        %v375 = vunpack.c.l.b16 %v370
        %v376 = vpack.c.b16 %v373, %v373
        %v377 = vpack.c.b16 %v374, %v374
        %v378 = vpack.c.b16 %v375, %v375
        %379 = vrot.lane.b32.xlu0 %v376, 127
        %v380 = vpop.permute.xlu0 %379
        %381 = vrot.lane.b32.xlu0 %v377, 127
        %v382 = vpop.permute.xlu0 %381
        %383 = vrot.lane.b32.xlu0 %v378, 127
        %v384 = vpop.permute.xlu0 %383
        %vm385 = vcmask 1039360
        %v386 = vsel %vm385, %v380, %v382
        %v387 = vsel %vm385, %v382, %v384
        %388 = vrot.lane.b32.xlu0 %v376, 126
        %v389 = vpop.permute.xlu0 %388
        %390 = vrot.lane.b32.xlu0 %v377, 126
        %v391 = vpop.permute.xlu0 %390
        %392 = vrot.lane.b32.xlu0 %v378, 126
        %v393 = vpop.permute.xlu0 %392
        %vm394 = vcmask 1031168
        %v395 = vsel %vm394, %v389, %v391
        %v396 = vsel %vm394, %v391, %v393
        %397 = vrot.lane.b32.xlu0 %v376, 110
        %v398 = vpop.permute.xlu0 %397
        %399 = vrot.lane.b32.xlu0 %v377, 110
        %v400 = vpop.permute.xlu0 %399
        %401 = vrot.lane.b32.xlu0 %v378, 110
        %v402 = vpop.permute.xlu0 %401
        %vm403 = vcmask 900096
        %v404 = vsel %vm403, %v398, %v400
        %v405 = vsel %vm403, %v400, %v402
        %406 = vrot.lane.b32.xlu0 %v376, 109
        %v407 = vpop.permute.xlu0 %406
        %408 = vrot.lane.b32.xlu0 %v377, 109
        %v409 = vpop.permute.xlu0 %408
        %410 = vrot.lane.b32.xlu0 %v378, 109
        %v411 = vpop.permute.xlu0 %410
        %vm412 = vcmask 891904
        %v413 = vsel %vm412, %v407, %v409
        %v414 = vsel %vm412, %v409, %v411
        %415 = vrot.lane.b32.xlu0 %v376, 108
        %v416 = vpop.permute.xlu0 %415
        %417 = vrot.lane.b32.xlu0 %v377, 108
        %v418 = vpop.permute.xlu0 %417
        %419 = vrot.lane.b32.xlu0 %v378, 108
        %v420 = vpop.permute.xlu0 %419
        %vm421 = vcmask 883712
        %v422 = vsel %vm421, %v416, %v418
        %v423 = vsel %vm421, %v418, %v420
        %424 = vrot.lane.b32.xlu0 %v376, 92
        %v425 = vpop.permute.xlu0 %424
        %426 = vrot.lane.b32.xlu0 %v377, 92
        %v427 = vpop.permute.xlu0 %426
        %428 = vrot.lane.b32.xlu0 %v378, 92
        %v429 = vpop.permute.xlu0 %428
        %vm430 = vcmask 752640
        %v431 = vsel %vm430, %v425, %v427
        %v432 = vsel %vm430, %v427, %v429
        %433 = vrot.lane.b32.xlu0 %v376, 91
        %v434 = vpop.permute.xlu0 %433
        %435 = vrot.lane.b32.xlu0 %v377, 91
        %v436 = vpop.permute.xlu0 %435
        %437 = vrot.lane.b32.xlu0 %v378, 91
        %v438 = vpop.permute.xlu0 %437
        %vm439 = vcmask 744448
        %v440 = vsel %vm439, %v434, %v436
        %v441 = vsel %vm439, %v436, %v438
        %442 = vrot.lane.b32.xlu0 %v376, 90
        %v443 = vpop.permute.xlu0 %442
        %444 = vrot.lane.b32.xlu0 %v377, 90
        %v445 = vpop.permute.xlu0 %444
        %446 = vrot.lane.b32.xlu0 %v378, 90
        %v447 = vpop.permute.xlu0 %446
        %vm448 = vcmask 736256
        %v449 = vsel %vm448, %v443, %v445
        %v450 = vsel %vm448, %v445, %v447
        %vm451 = vcmask 1043456
        %v454 = vsel %vm451, %v376, %v386
        %v458 = vsel %vm451, %v377, %v387
        %v462 = vsel %vm451, %v378, %v384
        %v466 = vsel %vm451, %v395, %v404
        %v470 = vsel %vm451, %v396, %v405
        %v474 = vsel %vm451, %v393, %v402
        %v478 = vsel %vm451, %v413, %v422
        %v482 = vsel %vm451, %v414, %v423
        %v486 = vsel %vm451, %v411, %v420
        %v490 = vsel %vm451, %v431, %v440
        %v494 = vsel %vm451, %v432, %v441
        %v498 = vsel %vm451, %v429, %v438
        %v500 = vld [vmem:[%s5] sm:$0xf]
        %v501 = vld [vmem:[%s5 + $0x4] sm:$0xf]
        %v502 = vld [vmem:[%s5 + $0x8] sm:$0xf]
        %v503 = vld [vmem:[%s5 + $0xc] sm:$0xf]
        %v504 = vld [vmem:[%s5 + $0x10] sm:$0xf]
        %v505 = vld [vmem:[%s5 + $0x14] sm:$0xf]
        %v506 = vld [vmem:[%s5 + $0x18] sm:$0xf]
        %v507 = vld [vmem:[%s5 + $0x1c] sm:$0xf]
        %v508 = vld [vmem:[%s5 + $0x20] sm:$0xf]
        %v509 = vld [vmem:[%s5 + $0x24] sm:$0xf]
        %v510 = vld [vmem:[%s5 + $0x28] sm:$0xf]
        %v511 = vld [vmem:[%s5 + $0x2c] sm:$0xf]
        %v512 = vld [vmem:[%s5 + $0x30] sm:$0xf]
        %v513 = vld [vmem:[%s5 + $0x34] sm:$0xf]
        %v514 = vld [vmem:[%s5 + $0x38] sm:$0xf]
        %v515 = vld [vmem:[%s5 + $0x3c] sm:$0xf]
        %v516 = vld [vmem:[%s6] sm:$0xff]
        %v517 = vld [vmem:[%s6 + $0x8] sm:$0xff]
        %v518 = vld [vmem:[%s6 + $0x10] sm:$0xff]
        %v519 = vld [vmem:[%s6 + $0x18] sm:$0xff]
        %v520 = vld [vmem:[%s6 + $0x20] sm:$0xff]
        %v521 = vld [vmem:[%s6 + $0x28] sm:$0xff]
        %v522 = vld [vmem:[%s6 + $0x30] sm:$0xff]
        %v523 = vld [vmem:[%s6 + $0x38] sm:$0xff]
        %v524 = vld [vmem:[%s6 + $0x40] sm:$0xff]
        %v525 = vld [vmem:[%s6 + $0x48] sm:$0xff]
        %v526 = vld [vmem:[%s6 + $0x50] sm:$0xff]
        %v527 = vld [vmem:[%s6 + $0x58] sm:$0xff]
        %v528 = vld [vmem:[%s6 + $0x60] sm:$0xff]
        %v529 = vld [vmem:[%s6 + $0x68] sm:$0xff]
        %v530 = vld [vmem:[%s6 + $0x70] sm:$0xff]
        %v531 = vld [vmem:[%s6 + $0x78] sm:$0xff]
        %533 = vset.pattern.permute.xlu0 0
        %534 = vperm.xlu0 %533, %v516
        %v535 = vpop.permute.xlu0 %534
        %538 = vset.pattern.permute.xlu0 0
        %539 = vperm.xlu0 %538, %v517
        %v540 = vpop.permute.xlu0 %539
        %543 = vset.pattern.permute.xlu0 0
        %544 = vperm.xlu0 %543, %v518
        %v545 = vpop.permute.xlu0 %544
        %548 = vset.pattern.permute.xlu0 0
        %549 = vperm.xlu0 %548, %v519
        %v550 = vpop.permute.xlu0 %549
        %553 = vset.pattern.permute.xlu0 0
        %554 = vperm.xlu0 %553, %v520
        %v555 = vpop.permute.xlu0 %554
        %558 = vset.pattern.permute.xlu0 0
        %559 = vperm.xlu0 %558, %v521
        %v560 = vpop.permute.xlu0 %559
        %563 = vset.pattern.permute.xlu0 0
        %564 = vperm.xlu0 %563, %v522
        %v565 = vpop.permute.xlu0 %564
        %568 = vset.pattern.permute.xlu0 0
        %569 = vperm.xlu0 %568, %v523
        %v570 = vpop.permute.xlu0 %569
        %573 = vset.pattern.permute.xlu0 0
        %574 = vperm.xlu0 %573, %v524
        %v575 = vpop.permute.xlu0 %574
        %578 = vset.pattern.permute.xlu0 0
        %579 = vperm.xlu0 %578, %v525
        %v580 = vpop.permute.xlu0 %579
        %583 = vset.pattern.permute.xlu0 0
        %584 = vperm.xlu0 %583, %v526
        %v585 = vpop.permute.xlu0 %584
        %588 = vset.pattern.permute.xlu0 0
        %589 = vperm.xlu0 %588, %v527
        %v590 = vpop.permute.xlu0 %589
        %593 = vset.pattern.permute.xlu0 0
        %594 = vperm.xlu0 %593, %v528
        %v595 = vpop.permute.xlu0 %594
        %598 = vset.pattern.permute.xlu0 0
        %599 = vperm.xlu0 %598, %v529
        %v600 = vpop.permute.xlu0 %599
        %603 = vset.pattern.permute.xlu0 0
        %604 = vperm.xlu0 %603, %v530
        %v605 = vpop.permute.xlu0 %604
        %608 = vset.pattern.permute.xlu0 0
        %609 = vperm.xlu0 %608, %v531
        %v610 = vpop.permute.xlu0 %609
        %v628 = vunpack.c.l.b16 %v500
        %v629 = vunpack.c.l.b16 %v501
        %v630 = vunpack.c.l.b16 %v502
        %v631 = vunpack.c.l.b16 %v503
        %v632 = vunpack.c.l.b16 %v504
        %v633 = vunpack.c.l.b16 %v505
        %v634 = vunpack.c.l.b16 %v506
        %v635 = vunpack.c.l.b16 %v507
        %v636 = vunpack.c.l.b16 %v508
        %v637 = vunpack.c.l.b16 %v509
        %v638 = vunpack.c.l.b16 %v510
        %v639 = vunpack.c.l.b16 %v511
        %v640 = vunpack.c.l.b16 %v512
        %v641 = vunpack.c.l.b16 %v513
        %v642 = vunpack.c.l.b16 %v514
        %v643 = vunpack.c.l.b16 %v515
        %v644 = vpack.c.b16 %v629, %v628
        %v645 = vpack.c.b16 %v631, %v630
        %v646 = vpack.c.b16 %v633, %v632
        %v647 = vpack.c.b16 %v635, %v634
        %v648 = vpack.c.b16 %v637, %v636
        %v649 = vpack.c.b16 %v639, %v638
        %v650 = vpack.c.b16 %v641, %v640
        %v651 = vpack.c.b16 %v643, %v642
        %vm652 = vcmask 588800
        %v654 = vsel %vm652, %v644, 0
        %v657 = vsel %vm652, %v645, 0
        %v660 = vsel %vm652, %v646, 0
        %v663 = vsel %vm652, %v647, 0
        %v666 = vsel %vm652, %v648, 0
        %v669 = vsel %vm652, %v649, 0
        %v672 = vsel %vm652, %v650, 0
        %v675 = vsel %vm652, %v651, 0
        %v678 = vsel %vm451, %v449, 0
        %v681 = vsel %vm451, %v450, 0
        %v684 = vsel %vm451, %v447, 0
        %686 = vmatprep.subr.bf16.mxu0 %v458
        %687 = vmatpush1.bf16.msra.mxu0 %v454
        %688 = vmatprep.subr.bf16.mxu0 %v470
        %689 = vmatpush1.bf16.msra.mxu0 %v466
        %690 = vmatprep.subr.bf16.mxu0 %v482
        %691 = vmatpush1.bf16.msra.mxu0 %v478
        %692 = vmatprep.subr.bf16.mxu0 %v494
        %693 = vmatpush1.bf16.msra.mxu0 %v490
        %694 = vmatprep.subr.bf16.mxu0 %v681
        %695 = vmatpush1.bf16.msra.mxu0 %v678
        %696 = vmatprep.subr.bf16.mxu0 0
        %697 = vmatpush1.bf16.msra.mxu0 0
        %698 = vmatprep.subr.bf16.mxu0 0
        %699 = vmatpush1.bf16.msra.mxu0 0
        %700 = vmatprep.subr.bf16.mxu0 0
        %701 = vmatpush1.bf16.msra.mxu0 0
        %702 = vmatprep.subr.bf16.mxu0 0
        %703 = vmatpush1.bf16.msra.mxu0 0
        %704 = vmatprep.subr.bf16.mxu0 0
        %705 = vmatpush1.bf16.msra.mxu0 0
        %706 = vmatprep.subr.bf16.mxu0 0
        %707 = vmatpush1.bf16.msra.mxu0 0
        %708 = vmatprep.subr.bf16.mxu0 0
        %709 = vmatpush1.bf16.msra.mxu0 0
        %710 = vmatprep.subr.bf16.mxu0 0
        %711 = vmatpush1.bf16.msra.mxu0 0
        %712 = vmatprep.subr.bf16.mxu0 0
        %713 = vmatpush1.bf16.msra.mxu0 0
        %714 = vmatprep.subr.bf16.mxu0 0
        %715 = vmatpush1.bf16.msra.mxu0 0
        %716 = vmatprep.subr.bf16.mxu0 0
        %717 = vmatpush1.bf16.msra.mxu0 0
        %718 = vmatprep.mubr.bf16.mxu0 0
        %719 = vmatmul.mubr.bf16.gmra.mrb[0].mxu0 %v654
        %v720 = vpop.f32.mrb[0].mxu0
        %v721 = vadd.f32 %v535, %v720
        %v722 = vpop.f32.mrb[0].mxu0
        %v723 = vadd.f32 %v535, %v722
        %v724 = vpop.f32.mrb[0].mxu0
        %v725 = vadd.f32 %v540, %v724
        %v726 = vpop.f32.mrb[0].mxu0
        %v727 = vadd.f32 %v540, %v726
        %728 = vmatprep.mubr.bf16.mxu0 0
        %729 = vmatmul.mubr.bf16.gmra.mrb[0].mxu0 %v657
        %v730 = vpop.f32.mrb[0].mxu0
        %v731 = vadd.f32 %v545, %v730
        %v732 = vpop.f32.mrb[0].mxu0
        %v733 = vadd.f32 %v545, %v732
        %v734 = vpop.f32.mrb[0].mxu0
        %v735 = vadd.f32 %v550, %v734
        %v736 = vpop.f32.mrb[0].mxu0
        %v737 = vadd.f32 %v550, %v736
        %738 = vmatprep.mubr.bf16.mxu0 0
        %739 = vmatmul.mubr.bf16.gmra.mrb[0].mxu0 %v660
        %v740 = vpop.f32.mrb[0].mxu0
        %v741 = vadd.f32 %v555, %v740
        %v742 = vpop.f32.mrb[0].mxu0
        %v743 = vadd.f32 %v555, %v742
        %v744 = vpop.f32.mrb[0].mxu0
        %v745 = vadd.f32 %v560, %v744
        %v746 = vpop.f32.mrb[0].mxu0
        %v747 = vadd.f32 %v560, %v746
        %748 = vmatprep.mubr.bf16.mxu0 0
        %749 = vmatmul.mubr.bf16.gmra.mrb[0].mxu0 %v663
        %v750 = vpop.f32.mrb[0].mxu0
        %v751 = vadd.f32 %v565, %v750
        %v752 = vpop.f32.mrb[0].mxu0
        %v753 = vadd.f32 %v565, %v752
        %v754 = vpop.f32.mrb[0].mxu0
        %v755 = vadd.f32 %v570, %v754
        %v756 = vpop.f32.mrb[0].mxu0
        %v757 = vadd.f32 %v570, %v756
        %758 = vmatprep.mubr.bf16.mxu0 0
        %759 = vmatmul.mubr.bf16.gmra.mrb[0].mxu0 %v666
        %v760 = vpop.f32.mrb[0].mxu0
        %v761 = vadd.f32 %v575, %v760
        %v762 = vpop.f32.mrb[0].mxu0
        %v763 = vadd.f32 %v575, %v762
        %v764 = vpop.f32.mrb[0].mxu0
        %v765 = vadd.f32 %v580, %v764
        %v766 = vpop.f32.mrb[0].mxu0
        %v767 = vadd.f32 %v580, %v766
        %768 = vmatprep.mubr.bf16.mxu0 0
        %769 = vmatmul.mubr.bf16.gmra.mrb[0].mxu0 %v669
        %v770 = vpop.f32.mrb[0].mxu0
        %v771 = vadd.f32 %v585, %v770
        %v772 = vpop.f32.mrb[0].mxu0
        %v773 = vadd.f32 %v585, %v772
        %v774 = vpop.f32.mrb[0].mxu0
        %v775 = vadd.f32 %v590, %v774
        %v776 = vpop.f32.mrb[0].mxu0
        %v777 = vadd.f32 %v590, %v776
        %778 = vmatprep.mubr.bf16.mxu0 0
        %779 = vmatmul.mubr.bf16.gmra.mrb[0].mxu0 %v672
        %v780 = vpop.f32.mrb[0].mxu0
        %v781 = vadd.f32 %v595, %v780
        %v782 = vpop.f32.mrb[0].mxu0
        %v783 = vadd.f32 %v595, %v782
        %v784 = vpop.f32.mrb[0].mxu0
        %v785 = vadd.f32 %v600, %v784
        %v786 = vpop.f32.mrb[0].mxu0
        %v787 = vadd.f32 %v600, %v786
        %788 = vmatprep.mubr.bf16.mxu0 0
        %789 = vmatmul.mubr.bf16.gmra.mrb[0].mxu0 %v675
        %v790 = vpop.f32.mrb[0].mxu0
        %v791 = vadd.f32 %v605, %v790
        %v792 = vpop.f32.mrb[0].mxu0
        %v793 = vadd.f32 %v605, %v792
        %v794 = vpop.f32.mrb[0].mxu0
        %v795 = vadd.f32 %v610, %v794
        %v796 = vpop.f32.mrb[0].mxu0
        %v797 = vadd.f32 %v610, %v796
        %798 = vdwg.mxu0
        %799 = vmatprep.subr.bf16.mxu0 0
        %800 = vmatpush1.bf16.msra.mxu0 %v462
        %801 = vmatprep.subr.bf16.mxu0 0
        %802 = vmatpush1.bf16.msra.mxu0 %v474
        %803 = vmatprep.subr.bf16.mxu0 0
        %804 = vmatpush1.bf16.msra.mxu0 %v486
        %805 = vmatprep.subr.bf16.mxu0 0
        %806 = vmatpush1.bf16.msra.mxu0 %v498
        %807 = vmatprep.subr.bf16.mxu0 0
        %808 = vmatpush1.bf16.msra.mxu0 %v684
        %809 = vmatprep.subr.bf16.mxu0 0
        %810 = vmatpush1.bf16.msra.mxu0 0
        %811 = vmatprep.subr.bf16.mxu0 0
        %812 = vmatpush1.bf16.msra.mxu0 0
        %813 = vmatprep.subr.bf16.mxu0 0
        %814 = vmatpush1.bf16.msra.mxu0 0
        %815 = vmatprep.subr.bf16.mxu0 0
        %816 = vmatpush1.bf16.msra.mxu0 0
        %817 = vmatprep.subr.bf16.mxu0 0
        %818 = vmatpush1.bf16.msra.mxu0 0
        %819 = vmatprep.subr.bf16.mxu0 0
        %820 = vmatpush1.bf16.msra.mxu0 0
        %821 = vmatprep.subr.bf16.mxu0 0
        %822 = vmatpush1.bf16.msra.mxu0 0
        %823 = vmatprep.subr.bf16.mxu0 0
        %824 = vmatpush1.bf16.msra.mxu0 0
        %825 = vmatprep.subr.bf16.mxu0 0
        %826 = vmatpush1.bf16.msra.mxu0 0
        %827 = vmatprep.subr.bf16.mxu0 0
        %828 = vmatpush1.bf16.msra.mxu0 0
        %829 = vmatprep.subr.bf16.mxu0 0
        %830 = vmatpush1.bf16.msra.mxu0 0
        %831 = vmatprep.mubr.bf16.mxu0 0
        %832 = vmatmul.mubr.bf16.gmra.mrb[0].mxu0 %v654
        %v833 = vpop.f32.mrb[0].mxu0
        %v834 = vadd.f32 %v535, %v833
        %v835 = vpop.f32.mrb[0].mxu0
        %v836 = vpop.f32.mrb[0].mxu0
        %v837 = vadd.f32 %v540, %v836
        %v838 = vpop.f32.mrb[0].mxu0
        %839 = vmatprep.mubr.bf16.mxu0 0
        %840 = vmatmul.mubr.bf16.gmra.mrb[0].mxu0 %v657
        %v841 = vpop.f32.mrb[0].mxu0
        %v842 = vadd.f32 %v545, %v841
        %v843 = vpop.f32.mrb[0].mxu0
        %v844 = vpop.f32.mrb[0].mxu0
        %v845 = vadd.f32 %v550, %v844
        %v846 = vpop.f32.mrb[0].mxu0
        %847 = vmatprep.mubr.bf16.mxu0 0
        %848 = vmatmul.mubr.bf16.gmra.mrb[0].mxu0 %v660
        %v849 = vpop.f32.mrb[0].mxu0
        %v850 = vadd.f32 %v555, %v849
        %v851 = vpop.f32.mrb[0].mxu0
        %v852 = vpop.f32.mrb[0].mxu0
        %v853 = vadd.f32 %v560, %v852
        %v854 = vpop.f32.mrb[0].mxu0
        %855 = vmatprep.mubr.bf16.mxu0 0
        %856 = vmatmul.mubr.bf16.gmra.mrb[0].mxu0 %v663
        %v857 = vpop.f32.mrb[0].mxu0
        %v858 = vadd.f32 %v565, %v857
        %v859 = vpop.f32.mrb[0].mxu0
        %v860 = vpop.f32.mrb[0].mxu0
        %v861 = vadd.f32 %v570, %v860
        %v862 = vpop.f32.mrb[0].mxu0
        %863 = vmatprep.mubr.bf16.mxu0 0
        %864 = vmatmul.mubr.bf16.gmra.mrb[0].mxu0 %v666
        %v865 = vpop.f32.mrb[0].mxu0
        %v866 = vadd.f32 %v575, %v865
        %v867 = vpop.f32.mrb[0].mxu0
        %v868 = vpop.f32.mrb[0].mxu0
        %v869 = vadd.f32 %v580, %v868
        %v870 = vpop.f32.mrb[0].mxu0
        %871 = vmatprep.mubr.bf16.mxu0 0
        %872 = vmatmul.mubr.bf16.gmra.mrb[0].mxu0 %v669
        %v873 = vpop.f32.mrb[0].mxu0
        %v874 = vadd.f32 %v585, %v873
        %v875 = vpop.f32.mrb[0].mxu0
        %v876 = vpop.f32.mrb[0].mxu0
        %v877 = vadd.f32 %v590, %v876
        %v878 = vpop.f32.mrb[0].mxu0
        %879 = vmatprep.mubr.bf16.mxu0 0
        %880 = vmatmul.mubr.bf16.gmra.mrb[0].mxu0 %v672
        %v881 = vpop.f32.mrb[0].mxu0
        %v882 = vadd.f32 %v595, %v881
        %v883 = vpop.f32.mrb[0].mxu0
        %v884 = vpop.f32.mrb[0].mxu0
        %v885 = vadd.f32 %v600, %v884
        %v886 = vpop.f32.mrb[0].mxu0
        %887 = vmatprep.mubr.bf16.mxu0 0
        %888 = vmatmul.mubr.bf16.gmra.mrb[0].mxu0 %v675
        %v889 = vpop.f32.mrb[0].mxu0
        %v890 = vadd.f32 %v605, %v889
        %v891 = vpop.f32.mrb[0].mxu0
        %v892 = vpop.f32.mrb[0].mxu0
        %v893 = vadd.f32 %v610, %v892
        %v894 = vpop.f32.mrb[0].mxu0
        %895 = vdwg.mxu0
        %v896 = vmax.f32 %v721, 0.0
        %v897 = vmax.f32 %v723, 0.0
        %v898 = vmax.f32 %v834, 0.0
        %v899 = vmax.f32 %v725, 0.0
        %v900 = vmax.f32 %v727, 0.0
        %v901 = vmax.f32 %v837, 0.0
        %v902 = vmax.f32 %v731, 0.0
        %v903 = vmax.f32 %v733, 0.0
        %v904 = vmax.f32 %v842, 0.0
        %v905 = vmax.f32 %v735, 0.0
        %v906 = vmax.f32 %v737, 0.0
        %v907 = vmax.f32 %v845, 0.0
        %v908 = vmax.f32 %v741, 0.0
        %v909 = vmax.f32 %v743, 0.0
        %v910 = vmax.f32 %v850, 0.0
        %v911 = vmax.f32 %v745, 0.0
        %v912 = vmax.f32 %v747, 0.0
        %v913 = vmax.f32 %v853, 0.0
        %v914 = vmax.f32 %v751, 0.0
        %v915 = vmax.f32 %v753, 0.0
        %v916 = vmax.f32 %v858, 0.0
        %v917 = vmax.f32 %v755, 0.0
        %v918 = vmax.f32 %v757, 0.0
        %v919 = vmax.f32 %v861, 0.0
        %v920 = vmax.f32 %v761, 0.0
        %v921 = vmax.f32 %v763, 0.0
        %v922 = vmax.f32 %v866, 0.0
        %v923 = vmax.f32 %v765, 0.0
        %v924 = vmax.f32 %v767, 0.0
        %v925 = vmax.f32 %v869, 0.0
        %v926 = vmax.f32 %v771, 0.0
        %v927 = vmax.f32 %v773, 0.0
        %v928 = vmax.f32 %v874, 0.0
        %v929 = vmax.f32 %v775, 0.0
        %v930 = vmax.f32 %v777, 0.0
        %v931 = vmax.f32 %v877, 0.0
        %v932 = vmax.f32 %v781, 0.0
        %v933 = vmax.f32 %v783, 0.0
        %v934 = vmax.f32 %v882, 0.0
        %v935 = vmax.f32 %v785, 0.0
        %v936 = vmax.f32 %v787, 0.0
        %v937 = vmax.f32 %v885, 0.0
        %v938 = vmax.f32 %v791, 0.0
        %v939 = vmax.f32 %v793, 0.0
        %v940 = vmax.f32 %v890, 0.0
        %v941 = vmax.f32 %v795, 0.0
        %v942 = vmax.f32 %v797, 0.0
        %v943 = vmax.f32 %v893, 0.0
        %v944 = vld [vmem:[%s4] sm:$0x7]
        %v946 = vlaneseq
        %v947 = vshrl.u32 %v946, 7
        %v948 = vsub.s32 0, %v947
        %v949 = vrot.slane %v944, %v948
        %v950 = vlaneseq
        %v951 = vshrl.u32 %v950, 7
        %v952 = vsub.s32 1, %v951
        %v953 = vrot.slane %v944, %v952
        %v954 = vlaneseq
        %v955 = vshrl.u32 %v954, 7
        %v956 = vsub.s32 2, %v955
        %v957 = vrot.slane %v944, %v956
        %v961 = vmul.f32 %v896, %v949
        %v962 = vmul.f32 %v897, %v953
        %v963 = vmul.f32 %v898, %v957
        %v964 = vmul.f32 %v899, %v949
        %v965 = vmul.f32 %v900, %v953
        %v966 = vmul.f32 %v901, %v957
        %v967 = vmul.f32 %v902, %v949
        %v968 = vmul.f32 %v903, %v953
        %v969 = vmul.f32 %v904, %v957
        %v970 = vmul.f32 %v905, %v949
        %v971 = vmul.f32 %v906, %v953
        %v972 = vmul.f32 %v907, %v957
        %v973 = vmul.f32 %v908, %v949
        %v974 = vmul.f32 %v909, %v953
        %v975 = vmul.f32 %v910, %v957
        %v976 = vmul.f32 %v911, %v949
        %v977 = vmul.f32 %v912, %v953
        %v978 = vmul.f32 %v913, %v957
        %v979 = vmul.f32 %v914, %v949
        %v980 = vmul.f32 %v915, %v953
        %v981 = vmul.f32 %v916, %v957
        %v982 = vmul.f32 %v917, %v949
        %v983 = vmul.f32 %v918, %v953
        %v984 = vmul.f32 %v919, %v957
        %v985 = vmul.f32 %v920, %v949
        %v986 = vmul.f32 %v921, %v953
        %v987 = vmul.f32 %v922, %v957
        %v988 = vmul.f32 %v923, %v949
        %v989 = vmul.f32 %v924, %v953
        %v990 = vmul.f32 %v925, %v957
        %v991 = vmul.f32 %v926, %v949
        %v992 = vmul.f32 %v927, %v953
        %v993 = vmul.f32 %v928, %v957
        %v994 = vmul.f32 %v929, %v949
        %v995 = vmul.f32 %v930, %v953
        %v996 = vmul.f32 %v931, %v957
        %v997 = vmul.f32 %v932, %v949
        %v998 = vmul.f32 %v933, %v953
        %v999 = vmul.f32 %v934, %v957
        %v1000 = vmul.f32 %v935, %v949
        %v1001 = vmul.f32 %v936, %v953
        %v1002 = vmul.f32 %v937, %v957
        %v1003 = vmul.f32 %v938, %v949
        %v1004 = vmul.f32 %v939, %v953
        %v1005 = vmul.f32 %v940, %v957
        %v1006 = vmul.f32 %v941, %v949
        %v1007 = vmul.f32 %v942, %v953
        %v1008 = vmul.f32 %v943, %v957
        %v1009 = vpack.c.bf16 %v964, %v961
        %v1010 = vpack.c.bf16 %v965, %v962
        %v1011 = vpack.c.bf16 %v966, %v963
        %v1012 = vpack.c.bf16 %v970, %v967
        %v1013 = vpack.c.bf16 %v971, %v968
        %v1014 = vpack.c.bf16 %v972, %v969
        %v1015 = vpack.c.bf16 %v976, %v973
        %v1016 = vpack.c.bf16 %v977, %v974
        %v1017 = vpack.c.bf16 %v978, %v975
        %v1018 = vpack.c.bf16 %v982, %v979
        %v1019 = vpack.c.bf16 %v983, %v980
        %v1020 = vpack.c.bf16 %v984, %v981
        %v1021 = vpack.c.bf16 %v988, %v985
        %v1022 = vpack.c.bf16 %v989, %v986
        %v1023 = vpack.c.bf16 %v990, %v987
        %v1024 = vpack.c.bf16 %v994, %v991
        %v1025 = vpack.c.bf16 %v995, %v992
        %v1026 = vpack.c.bf16 %v996, %v993
        %v1027 = vpack.c.bf16 %v1000, %v997
        %v1028 = vpack.c.bf16 %v1001, %v998
        %v1029 = vpack.c.bf16 %v1002, %v999
        %v1030 = vpack.c.bf16 %v1006, %v1003
        %v1031 = vpack.c.bf16 %v1007, %v1004
        %v1032 = vpack.c.bf16 %v1008, %v1005
        %1033 = vst [vmem:[#allocation2] sm:$0xff] 0.0
        %1034 = vst [vmem:[#allocation2 + $0x8] sm:$0xff] 0.0
        %vm1035 = vcmask 867328
        %1036 = vst.msk [vmem:[#allocation2 + $0x10] sm:$0xff] %vm1035, 0.0
        %v1037 = vld [vmem:[%s7] sm:$0xf]
        %1038 = vmatprep.subr.bf16.mxu0 %v1010
        %1039 = vmatpush1.bf16.msra.mxu0 %v1009
        %1040 = vmatprep.subr.bf16.mxu0 %v1013
        %1041 = vmatpush1.bf16.msra.mxu0 %v1012
        %1042 = vmatprep.subr.bf16.mxu0 %v1016
        %1043 = vmatpush1.bf16.msra.mxu0 %v1015
        %1044 = vmatprep.subr.bf16.mxu0 %v1019
        %1045 = vmatpush1.bf16.msra.mxu0 %v1018
        %1046 = vmatprep.subr.bf16.mxu0 %v1022
        %1047 = vmatpush1.bf16.msra.mxu0 %v1021
        %1048 = vmatprep.subr.bf16.mxu0 %v1025
        %1049 = vmatpush1.bf16.msra.mxu0 %v1024
        %1050 = vmatprep.subr.bf16.mxu0 %v1028
        %1051 = vmatpush1.bf16.msra.mxu0 %v1027
        %1052 = vmatprep.subr.bf16.mxu0 %v1031
        %1053 = vmatpush1.bf16.msra.mxu0 %v1030
        %1054 = vmatprep.subr.bf16.mxu0 0
        %1055 = vmatpush1.bf16.msra.mxu0 0
        %1056 = vmatprep.subr.bf16.mxu0 0
        %1057 = vmatpush1.bf16.msra.mxu0 0
        %1058 = vmatprep.subr.bf16.mxu0 0
        %1059 = vmatpush1.bf16.msra.mxu0 0
        %1060 = vmatprep.subr.bf16.mxu0 0
        %1061 = vmatpush1.bf16.msra.mxu0 0
        %1062 = vmatprep.subr.bf16.mxu0 0
        %1063 = vmatpush1.bf16.msra.mxu0 0
        %1064 = vmatprep.subr.bf16.mxu0 0
        %1065 = vmatpush1.bf16.msra.mxu0 0
        %1066 = vmatprep.subr.bf16.mxu0 0
        %1067 = vmatpush1.bf16.msra.mxu0 0
        %1068 = vmatprep.subr.bf16.mxu0 0
        %1069 = vmatpush1.bf16.msra.mxu0 0
        %1070 = vmatprep.mubr.bf16.mxu0 0
        %1071 = vmatmul.mubr.bf16.gmra.mrb[0].mxu0 %v1037
        %v1072 = vpop.f32.mrb[0].mxu0
        %v1073 = vadd.f32 0.0, %v1072
        %v1074 = vpop.f32.mrb[0].mxu0
        %v1075 = vadd.f32 0.0, %v1074
        %v1076 = vpop.f32.mrb[0].mxu0
        %v1077 = vpop.f32.mrb[0].mxu0
        %1078 = vdwg.mxu0
        %1079 = vmatprep.subr.bf16.mxu0 0
        %1080 = vmatpush1.bf16.msra.mxu0 %v1011
        %1081 = vmatprep.subr.bf16.mxu0 0
        %1082 = vmatpush1.bf16.msra.mxu0 %v1014
        %1083 = vmatprep.subr.bf16.mxu0 0
        %1084 = vmatpush1.bf16.msra.mxu0 %v1017
        %1085 = vmatprep.subr.bf16.mxu0 0
        %1086 = vmatpush1.bf16.msra.mxu0 %v1020
        %1087 = vmatprep.subr.bf16.mxu0 0
        %1088 = vmatpush1.bf16.msra.mxu0 %v1023
        %1089 = vmatprep.subr.bf16.mxu0 0
        %1090 = vmatpush1.bf16.msra.mxu0 %v1026
        %1091 = vmatprep.subr.bf16.mxu0 0
        %1092 = vmatpush1.bf16.msra.mxu0 %v1029
        %1093 = vmatprep.subr.bf16.mxu0 0
        %1094 = vmatpush1.bf16.msra.mxu0 %v1032
        %1095 = vmatprep.subr.bf16.mxu0 0
        %1096 = vmatpush1.bf16.msra.mxu0 0
        %1097 = vmatprep.subr.bf16.mxu0 0
        %1098 = vmatpush1.bf16.msra.mxu0 0
        %1099 = vmatprep.subr.bf16.mxu0 0
        %1100 = vmatpush1.bf16.msra.mxu0 0
        %1101 = vmatprep.subr.bf16.mxu0 0
        %1102 = vmatpush1.bf16.msra.mxu0 0
        %1103 = vmatprep.subr.bf16.mxu0 0
        %1104 = vmatpush1.bf16.msra.mxu0 0
        %1105 = vmatprep.subr.bf16.mxu0 0
        %1106 = vmatpush1.bf16.msra.mxu0 0
        %1107 = vmatprep.subr.bf16.mxu0 0
        %1108 = vmatpush1.bf16.msra.mxu0 0
        %1109 = vmatprep.subr.bf16.mxu0 0
        %1110 = vmatpush1.bf16.msra.mxu0 0
        %1111 = vmatprep.mubr.bf16.mxu0 0
        %1112 = vmatmul.mubr.bf16.gmra.mrb[0].mxu0 %v1037
        %v1113 = vpop.f32.mrb[0].mxu0
        %v1114 = vadd.f32 0.0, %v1113
        %v1115 = vpop.f32.mrb[0].mxu0
        %v1116 = vpop.f32.mrb[0].mxu0
        %v1117 = vpop.f32.mrb[0].mxu0
        %1118 = vdwg.mxu0
        %v1119 = vld [vmem:[#allocation2] sm:$0xff]
        %v1120 = vld [vmem:[#allocation2 + $0x8] sm:$0xff]
        %v1121 = vld [vmem:[#allocation2 + $0x10] sm:$0xff]
        %1125 = vrot.lane.b32.xlu0 %v1073, 38
        %v1126 = vpop.permute.xlu0 %1125
        %1127 = vrot.lane.b32.xlu0 %v1075, 38
        %v1128 = vpop.permute.xlu0 %1127
        %1129 = vrot.lane.b32.xlu0 %v1114, 38
        %v1130 = vpop.permute.xlu0 %1129
        %vm1131 = vcmask 310272
        %v1132 = vsel %vm1131, %v1126, %v1128
        %v1133 = vsel %vm1131, %v1128, %v1130
        %v1137 = vadd.f32 %v1119, %v1126
        %v1138 = vadd.f32 %v1120, %v1132
        %v1139 = vadd.f32 %v1121, %v1133
        %vm1140 = vcmask 1047856
        %1141 = vst.msk [vmem:[#allocation2] sm:$0xff] %vm1140, %v1137
        %1142 = vst [vmem:[#allocation2 + $0x8] sm:$0xff] %v1138
        %1143 = vst.msk [vmem:[#allocation2 + $0x10] sm:$0xff] %vm1035, %v1139
        %s1144 = scalar_lea.vmem %s7, 4
        %v1145 = vld [vmem:[%s1144] sm:$0xf]
        %1146 = vmatprep.subr.bf16.mxu0 %v1010
        %1147 = vmatpush1.bf16.msra.mxu0 %v1009
        %1148 = vmatprep.subr.bf16.mxu0 %v1013
        %1149 = vmatpush1.bf16.msra.mxu0 %v1012
        %1150 = vmatprep.subr.bf16.mxu0 %v1016
        %1151 = vmatpush1.bf16.msra.mxu0 %v1015
        %1152 = vmatprep.subr.bf16.mxu0 %v1019
        %1153 = vmatpush1.bf16.msra.mxu0 %v1018
        %1154 = vmatprep.subr.bf16.mxu0 %v1022
        %1155 = vmatpush1.bf16.msra.mxu0 %v1021
        %1156 = vmatprep.subr.bf16.mxu0 %v1025
        %1157 = vmatpush1.bf16.msra.mxu0 %v1024
        %1158 = vmatprep.subr.bf16.mxu0 %v1028
        %1159 = vmatpush1.bf16.msra.mxu0 %v1027
        %1160 = vmatprep.subr.bf16.mxu0 %v1031
        %1161 = vmatpush1.bf16.msra.mxu0 %v1030
        %1162 = vmatprep.subr.bf16.mxu0 0
        %1163 = vmatpush1.bf16.msra.mxu0 0
        %1164 = vmatprep.subr.bf16.mxu0 0
        %1165 = vmatpush1.bf16.msra.mxu0 0
        %1166 = vmatprep.subr.bf16.mxu0 0
        %1167 = vmatpush1.bf16.msra.mxu0 0
        %1168 = vmatprep.subr.bf16.mxu0 0
        %1169 = vmatpush1.bf16.msra.mxu0 0
        %1170 = vmatprep.subr.bf16.mxu0 0
        %1171 = vmatpush1.bf16.msra.mxu0 0
        %1172 = vmatprep.subr.bf16.mxu0 0
        %1173 = vmatpush1.bf16.msra.mxu0 0
        %1174 = vmatprep.subr.bf16.mxu0 0
        %1175 = vmatpush1.bf16.msra.mxu0 0
        %1176 = vmatprep.subr.bf16.mxu0 0
        %1177 = vmatpush1.bf16.msra.mxu0 0
        %1178 = vmatprep.mubr.bf16.mxu0 0
        %1179 = vmatmul.mubr.bf16.gmra.mrb[0].mxu0 %v1145
        %v1180 = vpop.f32.mrb[0].mxu0
        %v1181 = vadd.f32 0.0, %v1180
        %v1182 = vpop.f32.mrb[0].mxu0
        %v1183 = vadd.f32 0.0, %v1182
        %v1184 = vpop.f32.mrb[0].mxu0
        %v1185 = vpop.f32.mrb[0].mxu0
        %1186 = vdwg.mxu0
        %1187 = vmatprep.subr.bf16.mxu0 0
        %1188 = vmatpush1.bf16.msra.mxu0 %v1011
        %1189 = vmatprep.subr.bf16.mxu0 0
        %1190 = vmatpush1.bf16.msra.mxu0 %v1014
        %1191 = vmatprep.subr.bf16.mxu0 0
        %1192 = vmatpush1.bf16.msra.mxu0 %v1017
        %1193 = vmatprep.subr.bf16.mxu0 0
        %1194 = vmatpush1.bf16.msra.mxu0 %v1020
        %1195 = vmatprep.subr.bf16.mxu0 0
        %1196 = vmatpush1.bf16.msra.mxu0 %v1023
        %1197 = vmatprep.subr.bf16.mxu0 0
        %1198 = vmatpush1.bf16.msra.mxu0 %v1026
        %1199 = vmatprep.subr.bf16.mxu0 0
        %1200 = vmatpush1.bf16.msra.mxu0 %v1029
        %1201 = vmatprep.subr.bf16.mxu0 0
        %1202 = vmatpush1.bf16.msra.mxu0 %v1032
        %1203 = vmatprep.subr.bf16.mxu0 0
        %1204 = vmatpush1.bf16.msra.mxu0 0
        %1205 = vmatprep.subr.bf16.mxu0 0
        %1206 = vmatpush1.bf16.msra.mxu0 0
        %1207 = vmatprep.subr.bf16.mxu0 0
        %1208 = vmatpush1.bf16.msra.mxu0 0
        %1209 = vmatprep.subr.bf16.mxu0 0
        %1210 = vmatpush1.bf16.msra.mxu0 0
        %1211 = vmatprep.subr.bf16.mxu0 0
        %1212 = vmatpush1.bf16.msra.mxu0 0
        %1213 = vmatprep.subr.bf16.mxu0 0
        %1214 = vmatpush1.bf16.msra.mxu0 0
        %1215 = vmatprep.subr.bf16.mxu0 0
        %1216 = vmatpush1.bf16.msra.mxu0 0
        %1217 = vmatprep.subr.bf16.mxu0 0
        %1218 = vmatpush1.bf16.msra.mxu0 0
        %1219 = vmatprep.mubr.bf16.mxu0 0
        %1220 = vmatmul.mubr.bf16.gmra.mrb[0].mxu0 %v1145
        %v1221 = vpop.f32.mrb[0].mxu0
        %v1222 = vadd.f32 0.0, %v1221
        %v1223 = vpop.f32.mrb[0].mxu0
        %v1224 = vpop.f32.mrb[0].mxu0
        %v1225 = vpop.f32.mrb[0].mxu0
        %1226 = vdwg.mxu0
        %v1227 = vld [vmem:[#allocation2] sm:$0xff]
        %v1228 = vld [vmem:[#allocation2 + $0x8] sm:$0xff]
        %v1229 = vld [vmem:[#allocation2 + $0x10] sm:$0xff]
        %1233 = vrot.lane.b32.xlu0 %v1181, 37
        %v1234 = vpop.permute.xlu0 %1233
        %1235 = vrot.lane.b32.xlu0 %v1183, 37
        %v1236 = vpop.permute.xlu0 %1235
        %1237 = vrot.lane.b32.xlu0 %v1222, 37
        %v1238 = vpop.permute.xlu0 %1237
        %vm1239 = vcmask 302080
        %v1240 = vsel %vm1239, %v1234, %v1236
        %v1241 = vsel %vm1239, %v1236, %v1238
        %v1245 = vadd.f32 %v1227, %v1234
        %v1246 = vadd.f32 %v1228, %v1240
        %v1247 = vadd.f32 %v1229, %v1241
        %vm1248 = vcmask 1047848
        %1249 = vst.msk [vmem:[#allocation2] sm:$0xff] %vm1248, %v1245
        %1250 = vst [vmem:[#allocation2 + $0x8] sm:$0xff] %v1246
        %vm1251 = vcmask 859136
        %1252 = vst.msk [vmem:[#allocation2 + $0x10] sm:$0xff] %vm1251, %v1247
        %s1253 = scalar_lea.vmem %s7, 8
        %v1254 = vld [vmem:[%s1253] sm:$0xf]
        %1255 = vmatprep.subr.bf16.mxu0 %v1010
        %1256 = vmatpush1.bf16.msra.mxu0 %v1009
        %1257 = vmatprep.subr.bf16.mxu0 %v1013
        %1258 = vmatpush1.bf16.msra.mxu0 %v1012
        %1259 = vmatprep.subr.bf16.mxu0 %v1016
        %1260 = vmatpush1.bf16.msra.mxu0 %v1015
        %1261 = vmatprep.subr.bf16.mxu0 %v1019
        %1262 = vmatpush1.bf16.msra.mxu0 %v1018
        %1263 = vmatprep.subr.bf16.mxu0 %v1022
        %1264 = vmatpush1.bf16.msra.mxu0 %v1021
        %1265 = vmatprep.subr.bf16.mxu0 %v1025
        %1266 = vmatpush1.bf16.msra.mxu0 %v1024
        %1267 = vmatprep.subr.bf16.mxu0 %v1028
        %1268 = vmatpush1.bf16.msra.mxu0 %v1027
        %1269 = vmatprep.subr.bf16.mxu0 %v1031
        %1270 = vmatpush1.bf16.msra.mxu0 %v1030
        %1271 = vmatprep.subr.bf16.mxu0 0
        %1272 = vmatpush1.bf16.msra.mxu0 0
        %1273 = vmatprep.subr.bf16.mxu0 0
        %1274 = vmatpush1.bf16.msra.mxu0 0
        %1275 = vmatprep.subr.bf16.mxu0 0
        %1276 = vmatpush1.bf16.msra.mxu0 0
        %1277 = vmatprep.subr.bf16.mxu0 0
        %1278 = vmatpush1.bf16.msra.mxu0 0
        %1279 = vmatprep.subr.bf16.mxu0 0
        %1280 = vmatpush1.bf16.msra.mxu0 0
        %1281 = vmatprep.subr.bf16.mxu0 0
        %1282 = vmatpush1.bf16.msra.mxu0 0
        %1283 = vmatprep.subr.bf16.mxu0 0
        %1284 = vmatpush1.bf16.msra.mxu0 0
        %1285 = vmatprep.subr.bf16.mxu0 0
        %1286 = vmatpush1.bf16.msra.mxu0 0
        %1287 = vmatprep.mubr.bf16.mxu0 0
        %1288 = vmatmul.mubr.bf16.gmra.mrb[0].mxu0 %v1254
        %v1289 = vpop.f32.mrb[0].mxu0
        %v1290 = vadd.f32 0.0, %v1289
        %v1291 = vpop.f32.mrb[0].mxu0
        %v1292 = vadd.f32 0.0, %v1291
        %v1293 = vpop.f32.mrb[0].mxu0
        %v1294 = vpop.f32.mrb[0].mxu0
        %1295 = vdwg.mxu0
        %1296 = vmatprep.subr.bf16.mxu0 0
        %1297 = vmatpush1.bf16.msra.mxu0 %v1011
        %1298 = vmatprep.subr.bf16.mxu0 0
        %1299 = vmatpush1.bf16.msra.mxu0 %v1014
        %1300 = vmatprep.subr.bf16.mxu0 0
        %1301 = vmatpush1.bf16.msra.mxu0 %v1017
        %1302 = vmatprep.subr.bf16.mxu0 0
        %1303 = vmatpush1.bf16.msra.mxu0 %v1020
        %1304 = vmatprep.subr.bf16.mxu0 0
        %1305 = vmatpush1.bf16.msra.mxu0 %v1023
        %1306 = vmatprep.subr.bf16.mxu0 0
        %1307 = vmatpush1.bf16.msra.mxu0 %v1026
        %1308 = vmatprep.subr.bf16.mxu0 0
        %1309 = vmatpush1.bf16.msra.mxu0 %v1029
        %1310 = vmatprep.subr.bf16.mxu0 0
        %1311 = vmatpush1.bf16.msra.mxu0 %v1032
        %1312 = vmatprep.subr.bf16.mxu0 0
        %1313 = vmatpush1.bf16.msra.mxu0 0
        %1314 = vmatprep.subr.bf16.mxu0 0
        %1315 = vmatpush1.bf16.msra.mxu0 0
        %1316 = vmatprep.subr.bf16.mxu0 0
        %1317 = vmatpush1.bf16.msra.mxu0 0
        %1318 = vmatprep.subr.bf16.mxu0 0
        %1319 = vmatpush1.bf16.msra.mxu0 0
        %1320 = vmatprep.subr.bf16.mxu0 0
        %1321 = vmatpush1.bf16.msra.mxu0 0
        %1322 = vmatprep.subr.bf16.mxu0 0
        %1323 = vmatpush1.bf16.msra.mxu0 0
        %1324 = vmatprep.subr.bf16.mxu0 0
        %1325 = vmatpush1.bf16.msra.mxu0 0
        %1326 = vmatprep.subr.bf16.mxu0 0
        %1327 = vmatpush1.bf16.msra.mxu0 0
        %1328 = vmatprep.mubr.bf16.mxu0 0
        %1329 = vmatmul.mubr.bf16.gmra.mrb[0].mxu0 %v1254
        %v1330 = vpop.f32.mrb[0].mxu0
        %v1331 = vadd.f32 0.0, %v1330
        %v1332 = vpop.f32.mrb[0].mxu0
        %v1333 = vpop.f32.mrb[0].mxu0
        %v1334 = vpop.f32.mrb[0].mxu0
        %1335 = vdwg.mxu0
        %v1336 = vld [vmem:[#allocation2] sm:$0xff]
        %v1337 = vld [vmem:[#allocation2 + $0x8] sm:$0xff]
        %v1338 = vld [vmem:[#allocation2 + $0x10] sm:$0xff]
        %1342 = vrot.lane.b32.xlu0 %v1290, 36
        %v1343 = vpop.permute.xlu0 %1342
        %1344 = vrot.lane.b32.xlu0 %v1292, 36
        %v1345 = vpop.permute.xlu0 %1344
        %1346 = vrot.lane.b32.xlu0 %v1331, 36
        %v1347 = vpop.permute.xlu0 %1346
        %vm1348 = vcmask 293888
        %v1349 = vsel %vm1348, %v1343, %v1345
        %v1350 = vsel %vm1348, %v1345, %v1347
        %v1354 = vadd.f32 %v1336, %v1343
        %v1355 = vadd.f32 %v1337, %v1349
        %v1356 = vadd.f32 %v1338, %v1350
        %vm1357 = vcmask 1047840
        %1358 = vst.msk [vmem:[#allocation2] sm:$0xff] %vm1357, %v1354
        %1359 = vst [vmem:[#allocation2 + $0x8] sm:$0xff] %v1355
        %vm1360 = vcmask 850944
        %1361 = vst.msk [vmem:[#allocation2 + $0x10] sm:$0xff] %vm1360, %v1356
        %s1362 = scalar_lea.vmem %s7, 12
        %v1363 = vld [vmem:[%s1362] sm:$0xf]
        %1364 = vmatprep.subr.bf16.mxu0 %v1010
        %1365 = vmatpush1.bf16.msra.mxu0 %v1009
        %1366 = vmatprep.subr.bf16.mxu0 %v1013
        %1367 = vmatpush1.bf16.msra.mxu0 %v1012
        %1368 = vmatprep.subr.bf16.mxu0 %v1016
        %1369 = vmatpush1.bf16.msra.mxu0 %v1015
        %1370 = vmatprep.subr.bf16.mxu0 %v1019
        %1371 = vmatpush1.bf16.msra.mxu0 %v1018
        %1372 = vmatprep.subr.bf16.mxu0 %v1022
        %1373 = vmatpush1.bf16.msra.mxu0 %v1021
        %1374 = vmatprep.subr.bf16.mxu0 %v1025
        %1375 = vmatpush1.bf16.msra.mxu0 %v1024
        %1376 = vmatprep.subr.bf16.mxu0 %v1028
        %1377 = vmatpush1.bf16.msra.mxu0 %v1027
        %1378 = vmatprep.subr.bf16.mxu0 %v1031
        %1379 = vmatpush1.bf16.msra.mxu0 %v1030
        %1380 = vmatprep.subr.bf16.mxu0 0
        %1381 = vmatpush1.bf16.msra.mxu0 0
        %1382 = vmatprep.subr.bf16.mxu0 0
        %1383 = vmatpush1.bf16.msra.mxu0 0
        %1384 = vmatprep.subr.bf16.mxu0 0
        %1385 = vmatpush1.bf16.msra.mxu0 0
        %1386 = vmatprep.subr.bf16.mxu0 0
        %1387 = vmatpush1.bf16.msra.mxu0 0
        %1388 = vmatprep.subr.bf16.mxu0 0
        %1389 = vmatpush1.bf16.msra.mxu0 0
        %1390 = vmatprep.subr.bf16.mxu0 0
        %1391 = vmatpush1.bf16.msra.mxu0 0
        %1392 = vmatprep.subr.bf16.mxu0 0
        %1393 = vmatpush1.bf16.msra.mxu0 0
        %1394 = vmatprep.subr.bf16.mxu0 0
        %1395 = vmatpush1.bf16.msra.mxu0 0
        %1396 = vmatprep.mubr.bf16.mxu0 0
        %1397 = vmatmul.mubr.bf16.gmra.mrb[0].mxu0 %v1363
        %v1398 = vpop.f32.mrb[0].mxu0
        %v1399 = vadd.f32 0.0, %v1398
        %v1400 = vpop.f32.mrb[0].mxu0
        %v1401 = vadd.f32 0.0, %v1400
        %v1402 = vpop.f32.mrb[0].mxu0
        %v1403 = vpop.f32.mrb[0].mxu0
        %1404 = vdwg.mxu0
        %1405 = vmatprep.subr.bf16.mxu0 0
        %1406 = vmatpush1.bf16.msra.mxu0 %v1011
        %1407 = vmatprep.subr.bf16.mxu0 0
        %1408 = vmatpush1.bf16.msra.mxu0 %v1014
        %1409 = vmatprep.subr.bf16.mxu0 0
        %1410 = vmatpush1.bf16.msra.mxu0 %v1017
        %1411 = vmatprep.subr.bf16.mxu0 0
        %1412 = vmatpush1.bf16.msra.mxu0 %v1020
        %1413 = vmatprep.subr.bf16.mxu0 0
        %1414 = vmatpush1.bf16.msra.mxu0 %v1023
        %1415 = vmatprep.subr.bf16.mxu0 0
        %1416 = vmatpush1.bf16.msra.mxu0 %v1026
        %1417 = vmatprep.subr.bf16.mxu0 0
        %1418 = vmatpush1.bf16.msra.mxu0 %v1029
        %1419 = vmatprep.subr.bf16.mxu0 0
        %1420 = vmatpush1.bf16.msra.mxu0 %v1032
        %1421 = vmatprep.subr.bf16.mxu0 0
        %1422 = vmatpush1.bf16.msra.mxu0 0
        %1423 = vmatprep.subr.bf16.mxu0 0
        %1424 = vmatpush1.bf16.msra.mxu0 0
        %1425 = vmatprep.subr.bf16.mxu0 0
        %1426 = vmatpush1.bf16.msra.mxu0 0
        %1427 = vmatprep.subr.bf16.mxu0 0
        %1428 = vmatpush1.bf16.msra.mxu0 0
        %1429 = vmatprep.subr.bf16.mxu0 0
        %1430 = vmatpush1.bf16.msra.mxu0 0
        %1431 = vmatprep.subr.bf16.mxu0 0
        %1432 = vmatpush1.bf16.msra.mxu0 0
        %1433 = vmatprep.subr.bf16.mxu0 0
        %1434 = vmatpush1.bf16.msra.mxu0 0
        %1435 = vmatprep.subr.bf16.mxu0 0
        %1436 = vmatpush1.bf16.msra.mxu0 0
        %1437 = vmatprep.mubr.bf16.mxu0 0
        %1438 = vmatmul.mubr.bf16.gmra.mrb[0].mxu0 %v1363
        %v1439 = vpop.f32.mrb[0].mxu0
        %v1440 = vadd.f32 0.0, %v1439
        %v1441 = vpop.f32.mrb[0].mxu0
        %v1442 = vpop.f32.mrb[0].mxu0
        %v1443 = vpop.f32.mrb[0].mxu0
        %1444 = vdwg.mxu0
        %v1445 = vld [vmem:[#allocation2] sm:$0xff]
        %v1446 = vld [vmem:[#allocation2 + $0x8] sm:$0xff]
        %v1447 = vld [vmem:[#allocation2 + $0x10] sm:$0xff]
        %1451 = vrot.lane.b32.xlu0 %v1399, 20
        %v1452 = vpop.permute.xlu0 %1451
        %1453 = vrot.lane.b32.xlu0 %v1401, 20
        %v1454 = vpop.permute.xlu0 %1453
        %1455 = vrot.lane.b32.xlu0 %v1440, 20
        %v1456 = vpop.permute.xlu0 %1455
        %vm1457 = vcmask 162816
        %v1458 = vsel %vm1457, %v1452, %v1454
        %v1459 = vsel %vm1457, %v1454, %v1456
        %v1463 = vadd.f32 %v1445, %v1452
        %v1464 = vadd.f32 %v1446, %v1458
        %v1465 = vadd.f32 %v1447, %v1459
        %vm1466 = vcmask 1047712
        %1467 = vst.msk [vmem:[#allocation2] sm:$0xff] %vm1466, %v1463
        %1468 = vst [vmem:[#allocation2 + $0x8] sm:$0xff] %v1464
        %vm1469 = vcmask 719872
        %1470 = vst.msk [vmem:[#allocation2 + $0x10] sm:$0xff] %vm1469, %v1465
        %s1471 = scalar_lea.vmem %s7, 16
        %v1472 = vld [vmem:[%s1471] sm:$0xf]
        %1473 = vmatprep.subr.bf16.mxu0 %v1010
        %1474 = vmatpush1.bf16.msra.mxu0 %v1009
        %1475 = vmatprep.subr.bf16.mxu0 %v1013
        %1476 = vmatpush1.bf16.msra.mxu0 %v1012
        %1477 = vmatprep.subr.bf16.mxu0 %v1016
        %1478 = vmatpush1.bf16.msra.mxu0 %v1015
        %1479 = vmatprep.subr.bf16.mxu0 %v1019
        %1480 = vmatpush1.bf16.msra.mxu0 %v1018
        %1481 = vmatprep.subr.bf16.mxu0 %v1022
        %1482 = vmatpush1.bf16.msra.mxu0 %v1021
        %1483 = vmatprep.subr.bf16.mxu0 %v1025
        %1484 = vmatpush1.bf16.msra.mxu0 %v1024
        %1485 = vmatprep.subr.bf16.mxu0 %v1028
        %1486 = vmatpush1.bf16.msra.mxu0 %v1027
        %1487 = vmatprep.subr.bf16.mxu0 %v1031
        %1488 = vmatpush1.bf16.msra.mxu0 %v1030
        %1489 = vmatprep.subr.bf16.mxu0 0
        %1490 = vmatpush1.bf16.msra.mxu0 0
        %1491 = vmatprep.subr.bf16.mxu0 0
        %1492 = vmatpush1.bf16.msra.mxu0 0
        %1493 = vmatprep.subr.bf16.mxu0 0
        %1494 = vmatpush1.bf16.msra.mxu0 0
        %1495 = vmatprep.subr.bf16.mxu0 0
        %1496 = vmatpush1.bf16.msra.mxu0 0
        %1497 = vmatprep.subr.bf16.mxu0 0
        %1498 = vmatpush1.bf16.msra.mxu0 0
        %1499 = vmatprep.subr.bf16.mxu0 0
        %1500 = vmatpush1.bf16.msra.mxu0 0
        %1501 = vmatprep.subr.bf16.mxu0 0
        %1502 = vmatpush1.bf16.msra.mxu0 0
        %1503 = vmatprep.subr.bf16.mxu0 0
        %1504 = vmatpush1.bf16.msra.mxu0 0
        %1505 = vmatprep.mubr.bf16.mxu0 0
        %1506 = vmatmul.mubr.bf16.gmra.mrb[0].mxu0 %v1472
        %v1507 = vpop.f32.mrb[0].mxu0
        %v1508 = vadd.f32 0.0, %v1507
        %v1509 = vpop.f32.mrb[0].mxu0
        %v1510 = vadd.f32 0.0, %v1509
        %v1511 = vpop.f32.mrb[0].mxu0
        %v1512 = vpop.f32.mrb[0].mxu0
        %1513 = vdwg.mxu0
        %1514 = vmatprep.subr.bf16.mxu0 0
        %1515 = vmatpush1.bf16.msra.mxu0 %v1011
        %1516 = vmatprep.subr.bf16.mxu0 0
        %1517 = vmatpush1.bf16.msra.mxu0 %v1014
        %1518 = vmatprep.subr.bf16.mxu0 0
        %1519 = vmatpush1.bf16.msra.mxu0 %v1017
        %1520 = vmatprep.subr.bf16.mxu0 0
        %1521 = vmatpush1.bf16.msra.mxu0 %v1020
        %1522 = vmatprep.subr.bf16.mxu0 0
        %1523 = vmatpush1.bf16.msra.mxu0 %v1023
        %1524 = vmatprep.subr.bf16.mxu0 0
        %1525 = vmatpush1.bf16.msra.mxu0 %v1026
        %1526 = vmatprep.subr.bf16.mxu0 0
        %1527 = vmatpush1.bf16.msra.mxu0 %v1029
        %1528 = vmatprep.subr.bf16.mxu0 0
        %1529 = vmatpush1.bf16.msra.mxu0 %v1032
        %1530 = vmatprep.subr.bf16.mxu0 0
        %1531 = vmatpush1.bf16.msra.mxu0 0
        %1532 = vmatprep.subr.bf16.mxu0 0
        %1533 = vmatpush1.bf16.msra.mxu0 0
        %1534 = vmatprep.subr.bf16.mxu0 0
        %1535 = vmatpush1.bf16.msra.mxu0 0
        %1536 = vmatprep.subr.bf16.mxu0 0
        %1537 = vmatpush1.bf16.msra.mxu0 0
        %1538 = vmatprep.subr.bf16.mxu0 0
        %1539 = vmatpush1.bf16.msra.mxu0 0
        %1540 = vmatprep.subr.bf16.mxu0 0
        %1541 = vmatpush1.bf16.msra.mxu0 0
        %1542 = vmatprep.subr.bf16.mxu0 0
        %1543 = vmatpush1.bf16.msra.mxu0 0
        %1544 = vmatprep.subr.bf16.mxu0 0
        %1545 = vmatpush1.bf16.msra.mxu0 0
        %1546 = vmatprep.mubr.bf16.mxu0 0
        %1547 = vmatmul.mubr.bf16.gmra.mrb[0].mxu0 %v1472
        %v1548 = vpop.f32.mrb[0].mxu0
        %v1549 = vadd.f32 0.0, %v1548
        %v1550 = vpop.f32.mrb[0].mxu0
        %v1551 = vpop.f32.mrb[0].mxu0
        %v1552 = vpop.f32.mrb[0].mxu0
        %1553 = vdwg.mxu0
        %v1554 = vld [vmem:[#allocation2] sm:$0xff]
        %v1555 = vld [vmem:[#allocation2 + $0x8] sm:$0xff]
        %v1556 = vld [vmem:[#allocation2 + $0x10] sm:$0xff]
        %1560 = vrot.lane.b32.xlu0 %v1508, 19
        %v1561 = vpop.permute.xlu0 %1560
        %1562 = vrot.lane.b32.xlu0 %v1510, 19
        %v1563 = vpop.permute.xlu0 %1562
        %1564 = vrot.lane.b32.xlu0 %v1549, 19
        %v1565 = vpop.permute.xlu0 %1564
        %vm1566 = vcmask 154624
        %v1567 = vsel %vm1566, %v1561, %v1563
        %v1568 = vsel %vm1566, %v1563, %v1565
        %v1572 = vadd.f32 %v1554, %v1561
        %v1573 = vadd.f32 %v1555, %v1567
        %v1574 = vadd.f32 %v1556, %v1568
        %vm1575 = vcmask 1047704
        %1576 = vst.msk [vmem:[#allocation2] sm:$0xff] %vm1575, %v1572
        %1577 = vst [vmem:[#allocation2 + $0x8] sm:$0xff] %v1573
        %vm1578 = vcmask 711680
        %1579 = vst.msk [vmem:[#allocation2 + $0x10] sm:$0xff] %vm1578, %v1574
        %s1580 = scalar_lea.vmem %s7, 20
        %v1581 = vld [vmem:[%s1580] sm:$0xf]
        %1582 = vmatprep.subr.bf16.mxu0 %v1010
        %1583 = vmatpush1.bf16.msra.mxu0 %v1009
        %1584 = vmatprep.subr.bf16.mxu0 %v1013
        %1585 = vmatpush1.bf16.msra.mxu0 %v1012
        %1586 = vmatprep.subr.bf16.mxu0 %v1016
        %1587 = vmatpush1.bf16.msra.mxu0 %v1015
        %1588 = vmatprep.subr.bf16.mxu0 %v1019
        %1589 = vmatpush1.bf16.msra.mxu0 %v1018
        %1590 = vmatprep.subr.bf16.mxu0 %v1022
        %1591 = vmatpush1.bf16.msra.mxu0 %v1021
        %1592 = vmatprep.subr.bf16.mxu0 %v1025
        %1593 = vmatpush1.bf16.msra.mxu0 %v1024
        %1594 = vmatprep.subr.bf16.mxu0 %v1028
        %1595 = vmatpush1.bf16.msra.mxu0 %v1027
        %1596 = vmatprep.subr.bf16.mxu0 %v1031
        %1597 = vmatpush1.bf16.msra.mxu0 %v1030
        %1598 = vmatprep.subr.bf16.mxu0 0
        %1599 = vmatpush1.bf16.msra.mxu0 0
        %1600 = vmatprep.subr.bf16.mxu0 0
        %1601 = vmatpush1.bf16.msra.mxu0 0
        %1602 = vmatprep.subr.bf16.mxu0 0
        %1603 = vmatpush1.bf16.msra.mxu0 0
        %1604 = vmatprep.subr.bf16.mxu0 0
        %1605 = vmatpush1.bf16.msra.mxu0 0
        %1606 = vmatprep.subr.bf16.mxu0 0
        %1607 = vmatpush1.bf16.msra.mxu0 0
        %1608 = vmatprep.subr.bf16.mxu0 0
        %1609 = vmatpush1.bf16.msra.mxu0 0
        %1610 = vmatprep.subr.bf16.mxu0 0
        %1611 = vmatpush1.bf16.msra.mxu0 0
        %1612 = vmatprep.subr.bf16.mxu0 0
        %1613 = vmatpush1.bf16.msra.mxu0 0
        %1614 = vmatprep.mubr.bf16.mxu0 0
        %1615 = vmatmul.mubr.bf16.gmra.mrb[0].mxu0 %v1581
        %v1616 = vpop.f32.mrb[0].mxu0
        %v1617 = vadd.f32 0.0, %v1616
        %v1618 = vpop.f32.mrb[0].mxu0
        %v1619 = vadd.f32 0.0, %v1618
        %v1620 = vpop.f32.mrb[0].mxu0
        %v1621 = vpop.f32.mrb[0].mxu0
        %1622 = vdwg.mxu0
        %1623 = vmatprep.subr.bf16.mxu0 0
        %1624 = vmatpush1.bf16.msra.mxu0 %v1011
        %1625 = vmatprep.subr.bf16.mxu0 0
        %1626 = vmatpush1.bf16.msra.mxu0 %v1014
        %1627 = vmatprep.subr.bf16.mxu0 0
        %1628 = vmatpush1.bf16.msra.mxu0 %v1017
        %1629 = vmatprep.subr.bf16.mxu0 0
        %1630 = vmatpush1.bf16.msra.mxu0 %v1020
        %1631 = vmatprep.subr.bf16.mxu0 0
        %1632 = vmatpush1.bf16.msra.mxu0 %v1023
        %1633 = vmatprep.subr.bf16.mxu0 0
        %1634 = vmatpush1.bf16.msra.mxu0 %v1026
        %1635 = vmatprep.subr.bf16.mxu0 0
        %1636 = vmatpush1.bf16.msra.mxu0 %v1029
        %1637 = vmatprep.subr.bf16.mxu0 0
        %1638 = vmatpush1.bf16.msra.mxu0 %v1032
        %1639 = vmatprep.subr.bf16.mxu0 0
        %1640 = vmatpush1.bf16.msra.mxu0 0
        %1641 = vmatprep.subr.bf16.mxu0 0
        %1642 = vmatpush1.bf16.msra.mxu0 0
        %1643 = vmatprep.subr.bf16.mxu0 0
        %1644 = vmatpush1.bf16.msra.mxu0 0
        %1645 = vmatprep.subr.bf16.mxu0 0
        %1646 = vmatpush1.bf16.msra.mxu0 0
        %1647 = vmatprep.subr.bf16.mxu0 0
        %1648 = vmatpush1.bf16.msra.mxu0 0
        %1649 = vmatprep.subr.bf16.mxu0 0
        %1650 = vmatpush1.bf16.msra.mxu0 0
        %1651 = vmatprep.subr.bf16.mxu0 0
        %1652 = vmatpush1.bf16.msra.mxu0 0
        %1653 = vmatprep.subr.bf16.mxu0 0
        %1654 = vmatpush1.bf16.msra.mxu0 0
        %1655 = vmatprep.mubr.bf16.mxu0 0
        %1656 = vmatmul.mubr.bf16.gmra.mrb[0].mxu0 %v1581
        %v1657 = vpop.f32.mrb[0].mxu0
        %v1658 = vadd.f32 0.0, %v1657
        %v1659 = vpop.f32.mrb[0].mxu0
        %v1660 = vpop.f32.mrb[0].mxu0
        %v1661 = vpop.f32.mrb[0].mxu0
        %1662 = vdwg.mxu0
        %v1663 = vld [vmem:[#allocation2] sm:$0xff]
        %v1664 = vld [vmem:[#allocation2 + $0x8] sm:$0xff]
        %v1665 = vld [vmem:[#allocation2 + $0x10] sm:$0xff]
        %1669 = vrot.lane.b32.xlu0 %v1617, 18
        %v1670 = vpop.permute.xlu0 %1669
        %1671 = vrot.lane.b32.xlu0 %v1619, 18
        %v1672 = vpop.permute.xlu0 %1671
        %1673 = vrot.lane.b32.xlu0 %v1658, 18
        %v1674 = vpop.permute.xlu0 %1673
        %vm1675 = vcmask 146432
        %v1676 = vsel %vm1675, %v1670, %v1672
        %v1677 = vsel %vm1675, %v1672, %v1674
        %v1681 = vadd.f32 %v1663, %v1670
        %v1682 = vadd.f32 %v1664, %v1676
        %v1683 = vadd.f32 %v1665, %v1677
        %vm1684 = vcmask 1047696
        %1685 = vst.msk [vmem:[#allocation2] sm:$0xff] %vm1684, %v1681
        %1686 = vst [vmem:[#allocation2 + $0x8] sm:$0xff] %v1682
        %vm1687 = vcmask 703488
        %1688 = vst.msk [vmem:[#allocation2 + $0x10] sm:$0xff] %vm1687, %v1683
        %s1689 = scalar_lea.vmem %s7, 24
        %v1690 = vld [vmem:[%s1689] sm:$0xf]
        %1691 = vmatprep.subr.bf16.mxu0 %v1010
        %1692 = vmatpush1.bf16.msra.mxu0 %v1009
        %1693 = vmatprep.subr.bf16.mxu0 %v1013
        %1694 = vmatpush1.bf16.msra.mxu0 %v1012
        %1695 = vmatprep.subr.bf16.mxu0 %v1016
        %1696 = vmatpush1.bf16.msra.mxu0 %v1015
        %1697 = vmatprep.subr.bf16.mxu0 %v1019
        %1698 = vmatpush1.bf16.msra.mxu0 %v1018
        %1699 = vmatprep.subr.bf16.mxu0 %v1022
        %1700 = vmatpush1.bf16.msra.mxu0 %v1021
        %1701 = vmatprep.subr.bf16.mxu0 %v1025
        %1702 = vmatpush1.bf16.msra.mxu0 %v1024
        %1703 = vmatprep.subr.bf16.mxu0 %v1028
        %1704 = vmatpush1.bf16.msra.mxu0 %v1027
        %1705 = vmatprep.subr.bf16.mxu0 %v1031
        %1706 = vmatpush1.bf16.msra.mxu0 %v1030
        %1707 = vmatprep.subr.bf16.mxu0 0
        %1708 = vmatpush1.bf16.msra.mxu0 0
        %1709 = vmatprep.subr.bf16.mxu0 0
        %1710 = vmatpush1.bf16.msra.mxu0 0
        %1711 = vmatprep.subr.bf16.mxu0 0
        %1712 = vmatpush1.bf16.msra.mxu0 0
        %1713 = vmatprep.subr.bf16.mxu0 0
        %1714 = vmatpush1.bf16.msra.mxu0 0
        %1715 = vmatprep.subr.bf16.mxu0 0
        %1716 = vmatpush1.bf16.msra.mxu0 0
        %1717 = vmatprep.subr.bf16.mxu0 0
        %1718 = vmatpush1.bf16.msra.mxu0 0
        %1719 = vmatprep.subr.bf16.mxu0 0
        %1720 = vmatpush1.bf16.msra.mxu0 0
        %1721 = vmatprep.subr.bf16.mxu0 0
        %1722 = vmatpush1.bf16.msra.mxu0 0
        %1723 = vmatprep.mubr.bf16.mxu0 0
        %1724 = vmatmul.mubr.bf16.gmra.mrb[0].mxu0 %v1690
        %v1725 = vpop.f32.mrb[0].mxu0
        %v1726 = vadd.f32 0.0, %v1725
        %v1727 = vpop.f32.mrb[0].mxu0
        %v1728 = vadd.f32 0.0, %v1727
        %v1729 = vpop.f32.mrb[0].mxu0
        %v1730 = vpop.f32.mrb[0].mxu0
        %1731 = vdwg.mxu0
        %1732 = vmatprep.subr.bf16.mxu0 0
        %1733 = vmatpush1.bf16.msra.mxu0 %v1011
        %1734 = vmatprep.subr.bf16.mxu0 0
        %1735 = vmatpush1.bf16.msra.mxu0 %v1014
        %1736 = vmatprep.subr.bf16.mxu0 0
        %1737 = vmatpush1.bf16.msra.mxu0 %v1017
        %1738 = vmatprep.subr.bf16.mxu0 0
        %1739 = vmatpush1.bf16.msra.mxu0 %v1020
        %1740 = vmatprep.subr.bf16.mxu0 0
        %1741 = vmatpush1.bf16.msra.mxu0 %v1023
        %1742 = vmatprep.subr.bf16.mxu0 0
        %1743 = vmatpush1.bf16.msra.mxu0 %v1026
        %1744 = vmatprep.subr.bf16.mxu0 0
        %1745 = vmatpush1.bf16.msra.mxu0 %v1029
        %1746 = vmatprep.subr.bf16.mxu0 0
        %1747 = vmatpush1.bf16.msra.mxu0 %v1032
        %1748 = vmatprep.subr.bf16.mxu0 0
        %1749 = vmatpush1.bf16.msra.mxu0 0
        %1750 = vmatprep.subr.bf16.mxu0 0
        %1751 = vmatpush1.bf16.msra.mxu0 0
        %1752 = vmatprep.subr.bf16.mxu0 0
        %1753 = vmatpush1.bf16.msra.mxu0 0
        %1754 = vmatprep.subr.bf16.mxu0 0
        %1755 = vmatpush1.bf16.msra.mxu0 0
        %1756 = vmatprep.subr.bf16.mxu0 0
        %1757 = vmatpush1.bf16.msra.mxu0 0
        %1758 = vmatprep.subr.bf16.mxu0 0
        %1759 = vmatpush1.bf16.msra.mxu0 0
        %1760 = vmatprep.subr.bf16.mxu0 0
        %1761 = vmatpush1.bf16.msra.mxu0 0
        %1762 = vmatprep.subr.bf16.mxu0 0
        %1763 = vmatpush1.bf16.msra.mxu0 0
        %1764 = vmatprep.mubr.bf16.mxu0 0
        %1765 = vmatmul.mubr.bf16.gmra.mrb[0].mxu0 %v1690
        %v1766 = vpop.f32.mrb[0].mxu0
        %v1767 = vadd.f32 0.0, %v1766
        %v1768 = vpop.f32.mrb[0].mxu0
        %v1769 = vpop.f32.mrb[0].mxu0
        %v1770 = vpop.f32.mrb[0].mxu0
        %1771 = vdwg.mxu0
        %v1772 = vld [vmem:[#allocation2] sm:$0xff]
        %v1773 = vld [vmem:[#allocation2 + $0x8] sm:$0xff]
        %v1774 = vld [vmem:[#allocation2 + $0x10] sm:$0xff]
        %1778 = vrot.lane.b32.xlu0 %v1726, 2
        %v1779 = vpop.permute.xlu0 %1778
        %1780 = vrot.lane.b32.xlu0 %v1728, 2
        %v1781 = vpop.permute.xlu0 %1780
        %1782 = vrot.lane.b32.xlu0 %v1767, 2
        %v1783 = vpop.permute.xlu0 %1782
        %vm1784 = vcmask 15360
        %v1785 = vsel %vm1784, %v1779, %v1781
        %v1786 = vsel %vm1784, %v1781, %v1783
        %v1790 = vadd.f32 %v1772, %v1779
        %v1791 = vadd.f32 %v1773, %v1785
        %v1792 = vadd.f32 %v1774, %v1786
        %vm1793 = vcmask 1047568
        %1794 = vst.msk [vmem:[#allocation2] sm:$0xff] %vm1793, %v1790
        %1795 = vst [vmem:[#allocation2 + $0x8] sm:$0xff] %v1791
        %vm1796 = vcmask 572416
        %1797 = vst.msk [vmem:[#allocation2 + $0x10] sm:$0xff] %vm1796, %v1792
        %s1798 = scalar_lea.vmem %s7, 28
        %v1799 = vld [vmem:[%s1798] sm:$0xf]
        %1800 = vmatprep.subr.bf16.mxu0 %v1010
        %1801 = vmatpush1.bf16.msra.mxu0 %v1009
        %1802 = vmatprep.subr.bf16.mxu0 %v1013
        %1803 = vmatpush1.bf16.msra.mxu0 %v1012
        %1804 = vmatprep.subr.bf16.mxu0 %v1016
        %1805 = vmatpush1.bf16.msra.mxu0 %v1015
        %1806 = vmatprep.subr.bf16.mxu0 %v1019
        %1807 = vmatpush1.bf16.msra.mxu0 %v1018
        %1808 = vmatprep.subr.bf16.mxu0 %v1022
        %1809 = vmatpush1.bf16.msra.mxu0 %v1021
        %1810 = vmatprep.subr.bf16.mxu0 %v1025
        %1811 = vmatpush1.bf16.msra.mxu0 %v1024
        %1812 = vmatprep.subr.bf16.mxu0 %v1028
        %1813 = vmatpush1.bf16.msra.mxu0 %v1027
        %1814 = vmatprep.subr.bf16.mxu0 %v1031
        %1815 = vmatpush1.bf16.msra.mxu0 %v1030
        %1816 = vmatprep.subr.bf16.mxu0 0
        %1817 = vmatpush1.bf16.msra.mxu0 0
        %1818 = vmatprep.subr.bf16.mxu0 0
        %1819 = vmatpush1.bf16.msra.mxu0 0
        %1820 = vmatprep.subr.bf16.mxu0 0
        %1821 = vmatpush1.bf16.msra.mxu0 0
        %1822 = vmatprep.subr.bf16.mxu0 0
        %1823 = vmatpush1.bf16.msra.mxu0 0
        %1824 = vmatprep.subr.bf16.mxu0 0
        %1825 = vmatpush1.bf16.msra.mxu0 0
        %1826 = vmatprep.subr.bf16.mxu0 0
        %1827 = vmatpush1.bf16.msra.mxu0 0
        %1828 = vmatprep.subr.bf16.mxu0 0
        %1829 = vmatpush1.bf16.msra.mxu0 0
        %1830 = vmatprep.subr.bf16.mxu0 0
        %1831 = vmatpush1.bf16.msra.mxu0 0
        %1832 = vmatprep.mubr.bf16.mxu0 0
        %1833 = vmatmul.mubr.bf16.gmra.mrb[0].mxu0 %v1799
        %v1834 = vpop.f32.mrb[0].mxu0
        %v1835 = vadd.f32 0.0, %v1834
        %v1836 = vpop.f32.mrb[0].mxu0
        %v1837 = vadd.f32 0.0, %v1836
        %v1838 = vpop.f32.mrb[0].mxu0
        %v1839 = vpop.f32.mrb[0].mxu0
        %1840 = vdwg.mxu0
        %1841 = vmatprep.subr.bf16.mxu0 0
        %1842 = vmatpush1.bf16.msra.mxu0 %v1011
        %1843 = vmatprep.subr.bf16.mxu0 0
        %1844 = vmatpush1.bf16.msra.mxu0 %v1014
        %1845 = vmatprep.subr.bf16.mxu0 0
        %1846 = vmatpush1.bf16.msra.mxu0 %v1017
        %1847 = vmatprep.subr.bf16.mxu0 0
        %1848 = vmatpush1.bf16.msra.mxu0 %v1020
        %1849 = vmatprep.subr.bf16.mxu0 0
        %1850 = vmatpush1.bf16.msra.mxu0 %v1023
        %1851 = vmatprep.subr.bf16.mxu0 0
        %1852 = vmatpush1.bf16.msra.mxu0 %v1026
        %1853 = vmatprep.subr.bf16.mxu0 0
        %1854 = vmatpush1.bf16.msra.mxu0 %v1029
        %1855 = vmatprep.subr.bf16.mxu0 0
        %1856 = vmatpush1.bf16.msra.mxu0 %v1032
        %1857 = vmatprep.subr.bf16.mxu0 0
        %1858 = vmatpush1.bf16.msra.mxu0 0
        %1859 = vmatprep.subr.bf16.mxu0 0
        %1860 = vmatpush1.bf16.msra.mxu0 0
        %1861 = vmatprep.subr.bf16.mxu0 0
        %1862 = vmatpush1.bf16.msra.mxu0 0
        %1863 = vmatprep.subr.bf16.mxu0 0
        %1864 = vmatpush1.bf16.msra.mxu0 0
        %1865 = vmatprep.subr.bf16.mxu0 0
        %1866 = vmatpush1.bf16.msra.mxu0 0
        %1867 = vmatprep.subr.bf16.mxu0 0
        %1868 = vmatpush1.bf16.msra.mxu0 0
        %1869 = vmatprep.subr.bf16.mxu0 0
        %1870 = vmatpush1.bf16.msra.mxu0 0
        %1871 = vmatprep.subr.bf16.mxu0 0
        %1872 = vmatpush1.bf16.msra.mxu0 0
        %1873 = vmatprep.mubr.bf16.mxu0 0
        %1874 = vmatmul.mubr.bf16.gmra.mrb[0].mxu0 %v1799
        %v1875 = vpop.f32.mrb[0].mxu0
        %v1876 = vadd.f32 0.0, %v1875
        %v1877 = vpop.f32.mrb[0].mxu0
        %v1878 = vpop.f32.mrb[0].mxu0
        %v1879 = vpop.f32.mrb[0].mxu0
        %1880 = vdwg.mxu0
        %v1881 = vld [vmem:[#allocation2] sm:$0xff]
        %v1882 = vld [vmem:[#allocation2 + $0x8] sm:$0xff]
        %v1883 = vld [vmem:[#allocation2 + $0x10] sm:$0xff]
        %1887 = vrot.lane.b32.xlu0 %v1835, 1
        %v1888 = vpop.permute.xlu0 %1887
        %1889 = vrot.lane.b32.xlu0 %v1837, 1
        %v1890 = vpop.permute.xlu0 %1889
        %1891 = vrot.lane.b32.xlu0 %v1876, 1
        %v1892 = vpop.permute.xlu0 %1891
        %vm1893 = vcmask 7168
        %v1894 = vsel %vm1893, %v1888, %v1890
        %v1895 = vsel %vm1893, %v1890, %v1892
        %v1899 = vadd.f32 %v1881, %v1888
        %v1900 = vadd.f32 %v1882, %v1894
        %v1901 = vadd.f32 %v1883, %v1895
        %vm1902 = vcmask 1047560
        %1903 = vst.msk [vmem:[#allocation2] sm:$0xff] %vm1902, %v1899
        %1904 = vst [vmem:[#allocation2 + $0x8] sm:$0xff] %v1900
        %vm1905 = vcmask 564224
        %1906 = vst.msk [vmem:[#allocation2 + $0x10] sm:$0xff] %vm1905, %v1901
        %s1907 = scalar_lea.vmem %s7, 32
        %v1908 = vld [vmem:[%s1907] sm:$0xf]
        %1909 = vmatprep.subr.bf16.mxu0 %v1010
        %1910 = vmatpush1.bf16.msra.mxu0 %v1009
        %1911 = vmatprep.subr.bf16.mxu0 %v1013
        %1912 = vmatpush1.bf16.msra.mxu0 %v1012
        %1913 = vmatprep.subr.bf16.mxu0 %v1016
        %1914 = vmatpush1.bf16.msra.mxu0 %v1015
        %1915 = vmatprep.subr.bf16.mxu0 %v1019
        %1916 = vmatpush1.bf16.msra.mxu0 %v1018
        %1917 = vmatprep.subr.bf16.mxu0 %v1022
        %1918 = vmatpush1.bf16.msra.mxu0 %v1021
        %1919 = vmatprep.subr.bf16.mxu0 %v1025
        %1920 = vmatpush1.bf16.msra.mxu0 %v1024
        %1921 = vmatprep.subr.bf16.mxu0 %v1028
        %1922 = vmatpush1.bf16.msra.mxu0 %v1027
        %1923 = vmatprep.subr.bf16.mxu0 %v1031
        %1924 = vmatpush1.bf16.msra.mxu0 %v1030
        %1925 = vmatprep.subr.bf16.mxu0 0
        %1926 = vmatpush1.bf16.msra.mxu0 0
        %1927 = vmatprep.subr.bf16.mxu0 0
        %1928 = vmatpush1.bf16.msra.mxu0 0
        %1929 = vmatprep.subr.bf16.mxu0 0
        %1930 = vmatpush1.bf16.msra.mxu0 0
        %1931 = vmatprep.subr.bf16.mxu0 0
        %1932 = vmatpush1.bf16.msra.mxu0 0
        %1933 = vmatprep.subr.bf16.mxu0 0
        %1934 = vmatpush1.bf16.msra.mxu0 0
        %1935 = vmatprep.subr.bf16.mxu0 0
        %1936 = vmatpush1.bf16.msra.mxu0 0
        %1937 = vmatprep.subr.bf16.mxu0 0
        %1938 = vmatpush1.bf16.msra.mxu0 0
        %1939 = vmatprep.subr.bf16.mxu0 0
        %1940 = vmatpush1.bf16.msra.mxu0 0
        %1941 = vmatprep.mubr.bf16.mxu0 0
        %1942 = vmatmul.mubr.bf16.gmra.mrb[0].mxu0 %v1908
        %v1943 = vpop.f32.mrb[0].mxu0
        %v1944 = vadd.f32 0.0, %v1943
        %v1945 = vpop.f32.mrb[0].mxu0
        %v1946 = vadd.f32 0.0, %v1945
        %v1947 = vpop.f32.mrb[0].mxu0
        %v1948 = vpop.f32.mrb[0].mxu0
        %1949 = vdwg.mxu0
        %1950 = vmatprep.subr.bf16.mxu0 0
        %1951 = vmatpush1.bf16.msra.mxu0 %v1011
        %1952 = vmatprep.subr.bf16.mxu0 0
        %1953 = vmatpush1.bf16.msra.mxu0 %v1014
        %1954 = vmatprep.subr.bf16.mxu0 0
        %1955 = vmatpush1.bf16.msra.mxu0 %v1017
        %1956 = vmatprep.subr.bf16.mxu0 0
        %1957 = vmatpush1.bf16.msra.mxu0 %v1020
        %1958 = vmatprep.subr.bf16.mxu0 0
        %1959 = vmatpush1.bf16.msra.mxu0 %v1023
        %1960 = vmatprep.subr.bf16.mxu0 0
        %1961 = vmatpush1.bf16.msra.mxu0 %v1026
        %1962 = vmatprep.subr.bf16.mxu0 0
        %1963 = vmatpush1.bf16.msra.mxu0 %v1029
        %1964 = vmatprep.subr.bf16.mxu0 0
        %1965 = vmatpush1.bf16.msra.mxu0 %v1032
        %1966 = vmatprep.subr.bf16.mxu0 0
        %1967 = vmatpush1.bf16.msra.mxu0 0
        %1968 = vmatprep.subr.bf16.mxu0 0
        %1969 = vmatpush1.bf16.msra.mxu0 0
        %1970 = vmatprep.subr.bf16.mxu0 0
        %1971 = vmatpush1.bf16.msra.mxu0 0
        %1972 = vmatprep.subr.bf16.mxu0 0
        %1973 = vmatpush1.bf16.msra.mxu0 0
        %1974 = vmatprep.subr.bf16.mxu0 0
        %1975 = vmatpush1.bf16.msra.mxu0 0
        %1976 = vmatprep.subr.bf16.mxu0 0
        %1977 = vmatpush1.bf16.msra.mxu0 0
        %1978 = vmatprep.subr.bf16.mxu0 0
        %1979 = vmatpush1.bf16.msra.mxu0 0
        %1980 = vmatprep.subr.bf16.mxu0 0
        %1981 = vmatpush1.bf16.msra.mxu0 0
        %1982 = vmatprep.mubr.bf16.mxu0 0
        %1983 = vmatmul.mubr.bf16.gmra.mrb[0].mxu0 %v1908
        %v1984 = vpop.f32.mrb[0].mxu0
        %v1985 = vadd.f32 0.0, %v1984
        %v1986 = vpop.f32.mrb[0].mxu0
        %v1987 = vpop.f32.mrb[0].mxu0
        %v1988 = vpop.f32.mrb[0].mxu0
        %1989 = vdwg.mxu0
        %v1990 = vld [vmem:[#allocation2] sm:$0xff]
        %v1991 = vld [vmem:[#allocation2 + $0x8] sm:$0xff]
        %v1992 = vld [vmem:[#allocation2 + $0x10] sm:$0xff]
        %v1993 = vadd.f32 %v1990, %v1944
        %v1994 = vadd.f32 %v1991, %v1946
        %v1995 = vadd.f32 %v1992, %v1985
        %1996 = vst [vmem:[#allocation2] sm:$0xff] %v1993
        %1997 = vst [vmem:[#allocation2 + $0x8] sm:$0xff] %v1994
        %vm1998 = vcmask 556032
        %1999 = vst.msk [vmem:[#allocation2 + $0x10] sm:$0xff] %vm1998, %v1995
        %v2000 = vld [vmem:[%s358] sm:$0xff]
        %v2001 = vld [vmem:[%s2] sm:$0xf]
        %v2002 = vld [vmem:[%s362] sm:$0x3]
        %2004 = vset.pattern.permute.xlu0 0
        %2005 = vperm.xlu0 %2004, %v2001
        %v2006 = vpop.permute.xlu0 %2005
        %v2009 = vlaneseq
        %v2010 = vshrl.u32 %v2009, 7
        %v2011 = vsub.s32 0, %v2010
        %v2012 = vrot.slane %v2002, %v2011
        %v2013 = vlaneseq
        %v2014 = vshrl.u32 %v2013, 7
        %v2015 = vsub.s32 1, %v2014
        %v2016 = vrot.slane %v2002, %v2015
        %v2019 = vmul.f32 %v2006, %v2012
        %v2020 = vmul.f32 %v2006, %v2016
        %v2023 = vcombine.low %v2019, %v2020
        %v2025 = vadd.f32 %v2000, %v2023
        %v2027 = vcombine.high %v2025, %v2025
        %v2029 = vsel %vm451, %v2025, 0.0
        %v2030 = vsel %vm451, %v2027, 0.0
        %v2031 = vadd.f32 %v2029, %v2030
        %2032 = vadd.xlane.f32.xlu0 %v2031
        %v2033 = vpop.xlane.xlu0 %2032
        %v2034 = vmul.f32 %v2025, %v2025
        %v2036 = vcombine.high %v2034, %v2034
        %v2038 = vsel %vm451, %v2034, 0.0
        %v2039 = vsel %vm451, %v2036, 0.0
        %v2040 = vadd.f32 %v2038, %v2039
        %2041 = vadd.xlane.f32.xlu0 %v2040
        %v2042 = vpop.xlane.xlu0 %2041
        %v2043 = vmul.f32 %v2033, 0.00390625
        %v2044 = vmul.f32 %v2042, 0.00390625
        %v2045 = vmul.f32 %v2043, %v2043
        %v2046 = vsub.f32 %v2044, %v2045
        %v2047 = vmax.f32 %v2046, 0.0
        %v2050 = vunpack.c.l.s4 839922192
        %v2051 = vunpack.c.0.s8 %v2050
        %v2052 = vlaneseq
        %v2053 = vshrl.u32 %v2052, 7
        %v2054 = vsub.s32 %v2051, %v2053
        %v2055 = vrot.slane %v2043, %v2054
        %v2057 = vsub.f32 %v2025, %v2055
        %v2058 = vadd.f32 %v2047, 1e-05
        %v2059 = vrsqrt.pop %v2058
        %v2062 = vunpack.c.l.s4 839922192
        %v2063 = vunpack.c.0.s8 %v2062
        %v2064 = vlaneseq
        %v2065 = vshrl.u32 %v2064, 7
        %v2066 = vsub.s32 %v2063, %v2065
        %v2067 = vrot.slane %v2059, %v2066
        %v2069 = vmul.f32 %v2057, %v2067
        %v2070 = vld [vmem:[#allocation2] sm:$0xff]
        %v2071 = vld [vmem:[#allocation2 + $0x8] sm:$0xff]
        %v2072 = vld [vmem:[#allocation2 + $0x10] sm:$0xff]
        %2074 = vrot.lane.b32.xlu0 %v2070, 90
        %v2075 = vpop.permute.xlu0 %2074
        %2077 = vrot.lane.b32.xlu0 %v2070, 88
        %v2078 = vpop.permute.xlu0 %2077
        %2080 = vrot.lane.b32.xlu0 %v2070, 86
        %v2081 = vpop.permute.xlu0 %2080
        %2083 = vrot.lane.b32.xlu0 %v2070, 84
        %v2084 = vpop.permute.xlu0 %2083
        %2086 = vrot.lane.b32.xlu0 %v2070, 82
        %v2087 = vpop.permute.xlu0 %2086
        %2090 = vrot.lane.b32.xlu0 %v2071, 80
        %v2091 = vpop.permute.xlu0 %2090
        %2093 = vrot.lane.b32.xlu0 %v2071, 78
        %v2094 = vpop.permute.xlu0 %2093
        %2096 = vrot.lane.b32.xlu0 %v2071, 76
        %v2097 = vpop.permute.xlu0 %2096
        %2099 = vrot.lane.b32.xlu0 %v2071, 74
        %v2100 = vpop.permute.xlu0 %2099
        %2102 = vrot.lane.b32.xlu0 %v2071, 72
        %v2103 = vpop.permute.xlu0 %2102
        %2105 = vrot.lane.b32.xlu0 %v2071, 70
        %v2106 = vpop.permute.xlu0 %2105
        %2108 = vrot.lane.b32.xlu0 %v2071, 68
        %v2109 = vpop.permute.xlu0 %2108
        %2112 = vrot.lane.b32.xlu0 %v2071, 66
        %v2113 = vpop.permute.xlu0 %2112
        %2114 = vrot.lane.b32.xlu0 %v2072, 66
        %v2115 = vpop.permute.xlu0 %2114
        %vm2116 = vcmask 539648
        %v2117 = vsel %vm2116, %v2113, %v2115
        %2119 = vrot.lane.b32.xlu0 %v2072, 64
        %v2120 = vpop.permute.xlu0 %2119
        %2122 = vrot.lane.b32.xlu0 %v2072, 62
        %v2123 = vpop.permute.xlu0 %2122
        %2125 = vrot.lane.b32.xlu0 %v2072, 60
        %v2126 = vpop.permute.xlu0 %2125
        %vm2128 = vcmask 130048
        %v2129 = vsel %vm2128, %v2075, %v2078
        %vm2130 = vcmask 261120
        %v2131 = vsel %vm2130, %v2129, %v2081
        %vm2132 = vcmask 392192
        %v2133 = vsel %vm2132, %v2131, %v2084
        %vm2134 = vcmask 523264
        %v2135 = vsel %vm2134, %v2133, %v2087
        %vm2136 = vcmask 654336
        %v2137 = vsel %vm2136, %v2135, %v2091
        %vm2138 = vcmask 785408
        %v2139 = vsel %vm2138, %v2137, %v2094
        %vm2140 = vcmask 916480
        %v2141 = vsel %vm2140, %v2139, %v2097
        %v2142 = vsel %vm2128, %v2100, %v2103
        %v2143 = vsel %vm2130, %v2142, %v2106
        %v2144 = vsel %vm2132, %v2143, %v2109
        %v2145 = vsel %vm2134, %v2144, %v2117
        %v2146 = vsel %vm2136, %v2145, %v2120
        %v2147 = vsel %vm2138, %v2146, %v2123
        %v2148 = vsel %vm2140, %v2147, %v2126
        %v2149 = vld [vmem:[%s8] sm:$0xff]
        %2151 = vset.pattern.permute.xlu0 0
        %2152 = vperm.xlu0 %2151, %v2149
        %v2153 = vpop.permute.xlu0 %2152
        %v2155 = vadd.f32 %v2141, %v2153
        %v2156 = vadd.f32 %v2148, %v2153
        %v2157 = vadd.f32 %v2155, 1.0
        %v2158 = vadd.f32 %v2156, 1.0
        %v2161 = vcombine.low %v2157, %v2158
        %v2163 = vmul.f32 %v2069, %v2161
        %v2166 = vcombine.high %v2155, %v2156
        %v2168 = vadd.f32 %v2163, %v2166
        %2169 = vst [vmem:[%s353] sm:$0xff] %v2168
        %s2170 = sand.u32 %s235, 1
        %s2171 = scalar_lea.sflag [#allocation4], %s2170
        %s2172 = sand.u32 %s235, 1
        %s2173 = smul.addr %s2172, 8
        %s2174 = scalar_lea.vmem [#allocation3], %s2173
        // Predicated region
        $region57: #{tpu_custom_call.1} parent=55 // pred_check
          %p2175 = pneg %p245
        $region58: #{tpu_custom_call.1} parent=55 // pred_check_branch
          %2177 = sbr.rel (%p2175) target = $region60
        $region59: #{tpu_custom_call.1} parent=55 // pred_region
          %s2179 = ssub.s32 128, 128
          %2180 = vsyncadd %s2171, %s2179
          %s2181 = smul.addr %s23, 2
          %s2182 = smul.addr %s2181, 64
          %s2183 = scalar_lea.hbm %s9, %s2182
          %s2185 = sshll.u32 %s2174, 4
          %s2186 = int_to_ptr.vmem [resolvable:$true] %s2185
          %2188 = dma.vmem_to_hbm [thread:$0]  %s2186, 128, %s2183, %s2171
        $region60: #{tpu_custom_call.1} parent=55 // pred_fallthru
          _
      $region56: #{tpu_custom_call.1} parent=5 // pred_fallthru
        _
      %p2189 = scmp.le.s32.totalorder 2, %s18
      // Predicated region
      $region61: #{tpu_custom_call.1} parent=5 // pred_check
        %p2190 = pneg %p2189
      $region62: #{tpu_custom_call.1} parent=5 // pred_check_branch
        %2192 = sbr.rel (%p2190) target = $region64
      $region63: #{tpu_custom_call.1} parent=5 // pred_region
        %s2193 = ssub.s32 %s18, 2
        // Predicated region
        $region65: #{tpu_custom_call.1} parent=63 // pred_check
          %p2194 = pneg %p251
        $region66: #{tpu_custom_call.1} parent=63 // pred_check_branch
          %2196 = sbr.rel (%p2194) target = $region68
        $region67: #{tpu_custom_call.1} parent=63 // pred_region
          %s2197 = sand.u32 %s236, 1
          %s2198 = scalar_lea.sflag [#allocation4], %s2197
          %s2199 = sand.u32 %s236, 1
          %s2200 = smul.addr %s2199, 8
          %s2201 = scalar_lea.vmem [#allocation3], %s2200
          %2202 = dma.done %s2198, 128
        $region68: #{tpu_custom_call.1} parent=63 // pred_fallthru
          _
      $region64: #{tpu_custom_call.1} parent=5 // pred_fallthru
        _
    $region6: #{tpu_custom_call.1} parent=1 // loop_footer
      %s22 = sadd.s32 1, %s18
    $region7: #{tpu_custom_call.1} parent=1 // loop_footer_branch
      %17 = sbr.rel target = $region3
    $region8: #{tpu_custom_call.1} parent=1 // loop_exit
      _
    %2203 = vsyncpa [#allocation4], 1
    %s2204 = scalar_lea.sflag [#allocation4], 1
    %2205 = vsyncpa %s2204, 1

</llo_original>
